<compile_context>
chip_gen: v7x
topology: tpu7x:2x2x1
jax: 0.10.0
libtpu: 0.0.40
codegen_flags: <defaults>
</compile_context>

<pallas_src>
import functools

import jax
import jax.numpy as jnp
from jax.experimental import pallas as pl
from jax.experimental.pallas import tpu as pltpu

IN_CH = 6
SEQ = 24                          # 13*L - 7 = 305  ->  L = 24
CONV_OUT = 7
CONV_LEN = SEQ - 1                # kernel_size=2, stride=1, padding=0 -> 23
CONV_FEAT = CONV_OUT * CONV_LEN   # 161
XFEAT = IN_CH * SEQ               # 144
FEAT = CONV_FEAT + XFEAT          # 305
CPAD = 176                        # 161 rounded up to a multiple of 8 (zero-padded)
H1, H2, OUT = 512, 32, 1
LN_EPS = 1e-5


# ---------------------------------------------------------------- kernel -----

def _layernorm(h, gamma, beta):
    """PyTorch LayerNorm over the last dim (biased var, eps=1e-5), all f32.

    One-pass formulation: var = E[h^2] - mu^2 (clamped at 0) -- one elementwise
    pass + one cross-lane reduction fewer than the naive two-pass version.
    """
    mu = jnp.mean(h, axis=-1, keepdims=True)
    ms = jnp.mean(h * h, axis=-1, keepdims=True)
    var = jnp.maximum(ms - mu * mu, 0.0)
    return (h - mu) * jax.lax.rsqrt(var + LN_EPS) * gamma + beta


def _mm(a, w):
    """2-D matmul, f32 accumulation.  Production path: bf16 weights -> LHS cast to
    bf16 in-VMEM at the MXU boundary.  f32 weights (validation only) use HIGHEST."""
    prec = jax.lax.Precision.HIGHEST if w.dtype == jnp.float32 else None
    return jnp.dot(a.astype(w.dtype), w, precision=prec,
                   preferred_element_type=jnp.float32)


def _dnet_kernel(xf_ref, at_ref, cb_ref, wc_ref, wx_ref, b1_ref, g1_ref, be1_ref,
                 w2_ref, b2_ref, g2_ref, be2_ref, w3_ref, b3_ref, o_ref):
    xf = xf_ref[...]                                            # (TB, 144) f32

    # conv1(k=2,s=1,p=0) + bias folded into one im2col-style matmul, then ReLU.
    # Columns 161..175 of A_T / cb are zero, so the pad stays exactly zero.
    c = jnp.maximum(_mm(xf, at_ref[...]) + cb_ref[...], 0.0)    # (TB, 176) f32

    # fc1 as two matmuls (conv half + raw-x half) -- no 305-wide concat/relayout.
    h = _mm(c, wc_ref[...]) + _mm(xf, wx_ref[...]) + b1_ref[...]        # (TB, 512)
    h = jnp.maximum(_layernorm(h, g1_ref[...], be1_ref[...]), 0.0)      # f32

    # fc2 -> (dropout: identity) -> ln2 -> relu
    h2 = _mm(h, w2_ref[...]) + b2_ref[...]                              # (TB, 32)
    h2 = jnp.maximum(_layernorm(h2, g2_ref[...], be2_ref[...]), 0.0)

    # fc3 (32 -> 1): VPU multiply + lane reduce (avoids a lane-width-1 MXU op).
    o_ref[...] = jnp.sum(h2 * w3_ref[...], axis=-1, keepdims=True) + b3_ref[...]


# ---------------------------------------------------------------- wrapper ----

def _round_up(n, m):
    return (n + m - 1) // m * m


def _batch_tile(B, block_b):
    # Multiple of 16 so the bf16 (16,128) min-tile sublane packing is always clean.
    tb = min(block_b, _round_up(B, 16))
    if B >= 512:
        # Guarantee grid >= 2 so dimension_semantics=("parallel",) actually splits
        # work across both v7x TensorCores (no-op on 1-TC v5e/v6e).  Skipped at
        # small B where the ~0.35us/step grid overhead would dominate.
        tb = min(tb, _round_up((B + 1) // 2, 16))
    return tb


@functools.partial(jax.jit, static_argnames=("block_b",))
def dnet_forward(x, kp, block_b=2048):
    B = x.shape[0]
    # torch x.flatten(1): free layout view on the contiguous input.  No dtype cast
    # and no batch padding here -- either would be a separate un-hidden HBM pass.
    # Partial trailing blocks are handled by Pallas' block clamping; garbage rows in
    # the last tile are row-local through LN and are never written back.
    xf = x.reshape(B, XFEAT)

    tb = _batch_tile(B, block_b)
    const = lambda i: (0, 0)                    # weights stay resident in VMEM
    row = lambda i: (i, 0)                      # batch-tiled input / output

    return pl.pallas_call(
        _dnet_kernel,
        out_shape=jax.ShapeDtypeStruct((B, OUT), jnp.float32),
        grid=(pl.cdiv(B, tb),),
        in_specs=[
            pl.BlockSpec((tb, XFEAT), row),
            pl.BlockSpec(kp["a_t"].shape, const),
            pl.BlockSpec(kp["cb"].shape, const),
            pl.BlockSpec(kp["wc"].shape, const),
            pl.BlockSpec(kp["wx"].shape, const),
            pl.BlockSpec(kp["b1"].shape, const),
            pl.BlockSpec(kp["g1"].shape, const),
            pl.BlockSpec(kp["be1"].shape, const),
            pl.BlockSpec(kp["w2"].shape, const),
            pl.BlockSpec(kp["b2"].shape, const),
            pl.BlockSpec(kp["g2"].shape, const),
            pl.BlockSpec(kp["be2"].shape, const),
            pl.BlockSpec(kp["w3r"].shape, const),
            pl.BlockSpec(kp["b3"].shape, const),
        ],
        out_specs=pl.BlockSpec((tb, OUT), row),
        compiler_params=pltpu.CompilerParams(
            dimension_semantics=("parallel",),      # 2x on v7x (2 TCs)
            vmem_limit_bytes=64 * 1024 * 1024),     # headroom for TB=2048 intermediates
    )(xf, kp["a_t"], kp["cb"], kp["wc"], kp["wx"], kp["b1"], kp["g1"], kp["be1"],
      kp["w2"], kp["b2"], kp["g2"], kp["be2"], kp["w3r"], kp["b3"])


# ------------------------------------------------------------ param init -----

def init_params(key):
    """Torch-layout parameters (what the nn.Module would hold)."""
    ks = jax.random.split(key, 8)

    def u(k, shape, fan_in):
        bound = 1.0 / jnp.sqrt(jnp.float32(fan_in))
        return jax.random.uniform(k, shape, jnp.float32, -bound, bound)

    return dict(
        conv_w=u(ks[0], (CONV_OUT, IN_CH, 2), IN_CH * 2),   # Conv1d weight (O, C, K)
        conv_b=u(ks[1], (CONV_OUT,), IN_CH * 2),
        fc1_w=u(ks[2], (FEAT, H1), FEAT),                   # (in, out) layout
        fc1_b=u(ks[3], (1, H1), FEAT),
        ln1_g=jnp.ones((1, H1), jnp.float32),
        ln1_b=jnp.zeros((1, H1), jnp.float32),
        fc2_w=u(ks[4], (H1, H2), H1),
        fc2_b=u(ks[5], (1, H2), H1),
        ln2_g=jnp.ones((1, H2), jnp.float32),
        ln2_b=jnp.zeros((1, H2), jnp.float32),
        fc3_w=u(ks[6], (H2, OUT), H2),
        fc3_b=u(ks[7], (1, OUT), H2),
    )


def pack_params(p, mxu_dtype=jnp.bfloat16):
    """One-time weight-layout prep for the fused kernel.

    A_T[(i*24+s), (o*23+t)] = conv_w[o,i,s-t] for s-t in {0,1}, else 0, so that
    x_flat @ A_T reproduces conv1 exactly (torch c.view(B,-1) ordering: o*23+t).
    fc1_w is split at row 161 (conv features first, raw x second, matching torch.cat).
    Production default stores matmul weights in bf16 (MXU operands, f32 accumulate);
    pass mxu_dtype=jnp.float32 for the full-precision validation path.
    Biases / LN params always stay f32.
    """
    w0 = p["conv_w"][:, :, 0]     # (7, 6)
    w1 = p["conv_w"][:, :, 1]     # (7, 6)
    o_idx, i_idx, t_idx = jnp.meshgrid(
        jnp.arange(CONV_OUT), jnp.arange(IN_CH), jnp.arange(CONV_LEN), indexing="ij")
    rows = (i_idx * SEQ + t_idx).ravel()
    cols = (o_idx * CONV_LEN + t_idx).ravel()
    a_t = jnp.zeros((XFEAT, CPAD), jnp.float32)
    a_t = a_t.at[rows, cols].set(w0[o_idx, i_idx].ravel())
    a_t = a_t.at[rows + 1, cols].set(w1[o_idx, i_idx].ravel())

    cb = jnp.zeros((1, CPAD), jnp.float32).at[0, :CONV_FEAT].set(
        jnp.repeat(p["conv_b"], CONV_LEN))
    wc = jnp.zeros((CPAD, H1), jnp.float32).at[:CONV_FEAT, :].set(
        p["fc1_w"][:CONV_FEAT])                    # zero-padded 161 -> 176 rows
    wx = p["fc1_w"][CONV_FEAT:]                    # (144, 512)

    return dict(
        a_t=a_t.astype(mxu_dtype), cb=cb,
        wc=wc.astype(mxu_dtype), wx=wx.astype(mxu_dtype),
        b1=p["fc1_b"], g1=p["ln1_g"], be1=p["ln1_b"],
        w2=p["fc2_w"].astype(mxu_dtype), b2=p["fc2_b"],
        g2=p["ln2_g"], be2=p["ln2_b"],
        w3r=p["fc3_w"].T,                          # (1, 32), kept f32 (VPU path)
        b3=p["fc3_b"],
    )


# ------------------------------------------------------------ reference ------

def dnet_reference(x, p):
    """Spec-faithful pure-JAX reference (f32, full matmul precision, two-pass LN)."""
    B = x.shape[0]
    w0 = p["conv_w"][:, :, 0]
    w1 = p["conv_w"][:, :, 1]
    c = (jnp.einsum("oc,bct->bot", w0, x[:, :, :CONV_LEN], precision="highest")
         + jnp.einsum("oc,bct->bot", w1, x[:, :, 1:], precision="highest")
         + p["conv_b"][None, :, None])
    c = jnp.maximum(c, 0.0)
    feat = jnp.concatenate([c.reshape(B, -1), x.reshape(B, -1)], axis=1)

    def ln(h, g, b):
        mu = jnp.mean(h, -1, keepdims=True)
        var = jnp.mean((h - mu) ** 2, -1, keepdims=True)
        return (h - mu) * jax.lax.rsqrt(var + LN_EPS) * g + b

    h = jnp.maximum(ln(jnp.dot(feat, p["fc1_w"], precision="highest") + p["fc1_b"],
                       p["ln1_g"], p["ln1_b"]), 0.0)
    h2 = jnp.maximum(ln(jnp.dot(h, p["fc2_w"], precision="highest") + p["fc2_b"],
                        p["ln2_g"], p["ln2_b"]), 0.0)
    return jnp.dot(h2, p["fc3_w"], precision="highest") + p["fc3_b"]


# ----------------------------------------------------------------- main ------

if __name__ == "__main__":
    key = jax.random.PRNGKey(0)
    kx, kparam = jax.random.split(key)
    B = 2
    x = jax.random.normal(kx, (B, IN_CH, SEQ), jnp.float32)     # (2, 6, 24)
    params = init_params(kparam)
    ref = dnet_reference(x, params)

    # Production default: bf16 MXU operands (f32 accumulate, f32 LN/ReLU/fc3).
    kp16 = pack_params(params)
    out16 = jax.block_until_ready(dnet_forward(x, kp16))
    assert out16.shape == (B, OUT), out16.shape
    assert jnp.allclose(out16, ref, atol=7.5e-2, rtol=5e-2), (out16, ref)

    # f32 + Precision.HIGHEST path: validation-only tight correctness check.
    kp32 = pack_params(params, jnp.float32)
    out32 = jax.block_until_ready(dnet_forward(x, kp32))
    assert out32.shape == (B, OUT), out32.shape
    assert jnp.allclose(out32, ref, atol=5e-5, rtol=1e-4), (out32, ref)

    print("KERNEL_OK")
</pallas_src>

<mosaic_0001>
module attributes {stable_mosaic.version = 11 : i64} {
  func.func @_dnet_kernel(%arg0: i32, %arg1: memref<16x144xf32, #tpu.memory_space<vmem>>, %arg2: memref<144x176xbf16, #tpu.memory_space<vmem>>, %arg3: memref<1x176xf32, #tpu.memory_space<vmem>>, %arg4: memref<176x512xbf16, #tpu.memory_space<vmem>>, %arg5: memref<144x512xbf16, #tpu.memory_space<vmem>>, %arg6: memref<1x512xf32, #tpu.memory_space<vmem>>, %arg7: memref<1x512xf32, #tpu.memory_space<vmem>>, %arg8: memref<1x512xf32, #tpu.memory_space<vmem>>, %arg9: memref<512x32xbf16, #tpu.memory_space<vmem>>, %arg10: memref<1x32xf32, #tpu.memory_space<vmem>>, %arg11: memref<1x32xf32, #tpu.memory_space<vmem>>, %arg12: memref<1x32xf32, #tpu.memory_space<vmem>>, %arg13: memref<1x32xf32, #tpu.memory_space<vmem>>, %arg14: memref<1x1xf32, #tpu.memory_space<vmem>>, %arg15: memref<16x1xf32, #tpu.memory_space<vmem>>) attributes {dimension_semantics = [#tpu.dimension_semantics<parallel>], iteration_bounds = array<i64: 1>, scalar_prefetch = 0 : i64, scratch_operands = 0 : i64, tpu.core_type = #tpu.core_type<tc>, window_params = [{transform_indices = @transform_0, window_bounds = array<i64: 16, 144>}, {pipeline_mode = #tpu.pipeline_mode<synchronous>, transform_indices = @transform_1, window_bounds = array<i64: 144, 176>}, {pipeline_mode = #tpu.pipeline_mode<synchronous>, transform_indices = @transform_2, window_bounds = array<i64: 1, 176>}, {pipeline_mode = #tpu.pipeline_mode<synchronous>, transform_indices = @transform_3, window_bounds = array<i64: 176, 512>}, {pipeline_mode = #tpu.pipeline_mode<synchronous>, transform_indices = @transform_4, window_bounds = array<i64: 144, 512>}, {pipeline_mode = #tpu.pipeline_mode<synchronous>, transform_indices = @transform_5, window_bounds = array<i64: 1, 512>}, {pipeline_mode = #tpu.pipeline_mode<synchronous>, transform_indices = @transform_6, window_bounds = array<i64: 1, 512>}, {pipeline_mode = #tpu.pipeline_mode<synchronous>, transform_indices = @transform_7, window_bounds = array<i64: 1, 512>}, {pipeline_mode = #tpu.pipeline_mode<synchronous>, transform_indices = @transform_8, window_bounds = array<i64: 512, 32>}, {pipeline_mode = #tpu.pipeline_mode<synchronous>, transform_indices = @transform_9, window_bounds = array<i64: 1, 32>}, {pipeline_mode = #tpu.pipeline_mode<synchronous>, transform_indices = @transform_10, window_bounds = array<i64: 1, 32>}, {pipeline_mode = #tpu.pipeline_mode<synchronous>, transform_indices = @transform_11, window_bounds = array<i64: 1, 32>}, {pipeline_mode = #tpu.pipeline_mode<synchronous>, transform_indices = @transform_12, window_bounds = array<i64: 1, 32>}, {pipeline_mode = #tpu.pipeline_mode<synchronous>, transform_indices = @transform_13, window_bounds = array<i64: 1, 1>}, {transform_indices = @transform_14, window_bounds = array<i64: 16, 1>}]} {
    %c0 = arith.constant 0 : index
    %c0_0 = arith.constant 0 : index
    %0 = vector.load %arg1[%c0, %c0_0] : memref<16x144xf32, #tpu.memory_space<vmem>>, vector<16x144xf32>
    %c0_1 = arith.constant 0 : index
    %c0_2 = arith.constant 0 : index
    %1 = vector.load %arg2[%c0_1, %c0_2] : memref<144x176xbf16, #tpu.memory_space<vmem>>, vector<144x176xbf16>
    %2 = arith.truncf %0 : vector<16x144xf32> to vector<16x144xbf16>
    %cst = arith.constant dense<0.000000e+00> : vector<16x176xf32>
    %3 = tpu.matmul %2, %1, %cst {dimension_numbers = #tpu.dot_dimension_numbers<[1], [0], [0], [1], [0, 0, 1, 1], [], []>} : vector<16x144xbf16>, vector<144x176xbf16>, vector<16x176xf32> -> vector<16x176xf32>
    %c0_3 = arith.constant 0 : index
    %c0_4 = arith.constant 0 : index
    %4 = vector.load %arg3[%c0_3, %c0_4] : memref<1x176xf32, #tpu.memory_space<vmem>>, vector<1x176xf32>
    %5 = vector.broadcast %4 : vector<1x176xf32> to vector<16x176xf32>
    %6 = arith.addf %3, %5 : vector<16x176xf32>
    %cst_5 = arith.constant 0.000000e+00 : f32
    %7 = vector.broadcast %cst_5 : f32 to vector<16x176xf32>
    %8 = arith.maximumf %6, %7 : vector<16x176xf32>
    %c0_6 = arith.constant 0 : index
    %c0_7 = arith.constant 0 : index
    %9 = vector.load %arg4[%c0_6, %c0_7] : memref<176x512xbf16, #tpu.memory_space<vmem>>, vector<176x512xbf16>
    %10 = arith.truncf %8 : vector<16x176xf32> to vector<16x176xbf16>
    %cst_8 = arith.constant dense<0.000000e+00> : vector<16x512xf32>
    %11 = tpu.matmul %10, %9, %cst_8 {dimension_numbers = #tpu.dot_dimension_numbers<[1], [0], [0], [1], [0, 0, 1, 1], [], []>} : vector<16x176xbf16>, vector<176x512xbf16>, vector<16x512xf32> -> vector<16x512xf32>
    %c0_9 = arith.constant 0 : index
    %c0_10 = arith.constant 0 : index
    %12 = vector.load %arg5[%c0_9, %c0_10] : memref<144x512xbf16, #tpu.memory_space<vmem>>, vector<144x512xbf16>
    %13 = arith.truncf %0 : vector<16x144xf32> to vector<16x144xbf16>
    %cst_11 = arith.constant dense<0.000000e+00> : vector<16x512xf32>
    %14 = tpu.matmul %13, %12, %cst_11 {dimension_numbers = #tpu.dot_dimension_numbers<[1], [0], [0], [1], [0, 0, 1, 1], [], []>} : vector<16x144xbf16>, vector<144x512xbf16>, vector<16x512xf32> -> vector<16x512xf32>
    %15 = arith.addf %11, %14 : vector<16x512xf32>
    %c0_12 = arith.constant 0 : index
    %c0_13 = arith.constant 0 : index
    %16 = vector.load %arg6[%c0_12, %c0_13] : memref<1x512xf32, #tpu.memory_space<vmem>>, vector<1x512xf32>
    %17 = vector.broadcast %16 : vector<1x512xf32> to vector<16x512xf32>
    %18 = arith.addf %15, %17 : vector<16x512xf32>
    %c0_14 = arith.constant 0 : index
    %c0_15 = arith.constant 0 : index
    %19 = vector.load %arg7[%c0_14, %c0_15] : memref<1x512xf32, #tpu.memory_space<vmem>>, vector<1x512xf32>
    %c0_16 = arith.constant 0 : index
    %c0_17 = arith.constant 0 : index
    %20 = vector.load %arg8[%c0_16, %c0_17] : memref<1x512xf32, #tpu.memory_space<vmem>>, vector<1x512xf32>
    %cst_18 = arith.constant dense<0.000000e+00> : vector<16xf32>
    %21 = vector.multi_reduction <add>, %18, %cst_18 [1] : vector<16x512xf32> to vector<16xf32>
    %22 = vector.shape_cast %21 : vector<16xf32> to vector<16x1xf32>
    %cst_19 = arith.constant 5.120000e+02 : f32
    %23 = vector.broadcast %cst_19 : f32 to vector<16x1xf32>
    %24 = arith.divf %22, %23 : vector<16x1xf32>
    %25 = arith.mulf %18, %18 : vector<16x512xf32>
    %cst_20 = arith.constant dense<0.000000e+00> : vector<16xf32>
    %26 = vector.multi_reduction <add>, %25, %cst_20 [1] : vector<16x512xf32> to vector<16xf32>
    %27 = vector.shape_cast %26 : vector<16xf32> to vector<16x1xf32>
    %cst_21 = arith.constant 5.120000e+02 : f32
    %28 = vector.broadcast %cst_21 : f32 to vector<16x1xf32>
    %29 = arith.divf %27, %28 : vector<16x1xf32>
    %30 = arith.mulf %24, %24 : vector<16x1xf32>
    %31 = arith.subf %29, %30 : vector<16x1xf32>
    %cst_22 = arith.constant 0.000000e+00 : f32
    %32 = vector.broadcast %cst_22 : f32 to vector<16x1xf32>
    %33 = arith.maximumf %31, %32 : vector<16x1xf32>
    %34 = vector.broadcast %24 : vector<16x1xf32> to vector<16x512xf32>
    %35 = arith.subf %18, %34 : vector<16x512xf32>
    %cst_23 = arith.constant 9.99999974E-6 : f32
    %36 = vector.broadcast %cst_23 : f32 to vector<16x1xf32>
    %37 = arith.addf %33, %36 : vector<16x1xf32>
    %38 = math.rsqrt %37 : vector<16x1xf32>
    %39 = vector.broadcast %38 : vector<16x1xf32> to vector<16x512xf32>
    %40 = arith.mulf %35, %39 : vector<16x512xf32>
    %41 = vector.broadcast %19 : vector<1x512xf32> to vector<16x512xf32>
    %42 = arith.mulf %40, %41 : vector<16x512xf32>
    %43 = vector.broadcast %20 : vector<1x512xf32> to vector<16x512xf32>
    %44 = arith.addf %42, %43 : vector<16x512xf32>
    %cst_24 = arith.constant 0.000000e+00 : f32
    %45 = vector.broadcast %cst_24 : f32 to vector<16x512xf32>
    %46 = arith.maximumf %44, %45 : vector<16x512xf32>
    %c0_25 = arith.constant 0 : index
    %c0_26 = arith.constant 0 : index
    %47 = vector.load %arg9[%c0_25, %c0_26] : memref<512x32xbf16, #tpu.memory_space<vmem>>, vector<512x32xbf16>
    %48 = arith.truncf %46 : vector<16x512xf32> to vector<16x512xbf16>
    %cst_27 = arith.constant dense<0.000000e+00> : vector<16x32xf32>
    %49 = tpu.matmul %48, %47, %cst_27 {dimension_numbers = #tpu.dot_dimension_numbers<[1], [0], [0], [1], [0, 0, 1, 1], [], []>} : vector<16x512xbf16>, vector<512x32xbf16>, vector<16x32xf32> -> vector<16x32xf32>
    %c0_28 = arith.constant 0 : index
    %c0_29 = arith.constant 0 : index
    %50 = vector.load %arg10[%c0_28, %c0_29] : memref<1x32xf32, #tpu.memory_space<vmem>>, vector<1x32xf32>
    %51 = vector.broadcast %50 : vector<1x32xf32> to vector<16x32xf32>
    %52 = arith.addf %49, %51 : vector<16x32xf32>
    %c0_30 = arith.constant 0 : index
    %c0_31 = arith.constant 0 : index
    %53 = vector.load %arg11[%c0_30, %c0_31] : memref<1x32xf32, #tpu.memory_space<vmem>>, vector<1x32xf32>
    %c0_32 = arith.constant 0 : index
    %c0_33 = arith.constant 0 : index
    %54 = vector.load %arg12[%c0_32, %c0_33] : memref<1x32xf32, #tpu.memory_space<vmem>>, vector<1x32xf32>
    %cst_34 = arith.constant dense<0.000000e+00> : vector<16xf32>
    %55 = vector.multi_reduction <add>, %52, %cst_34 [1] : vector<16x32xf32> to vector<16xf32>
    %56 = vector.shape_cast %55 : vector<16xf32> to vector<16x1xf32>
    %cst_35 = arith.constant 3.200000e+01 : f32
    %57 = vector.broadcast %cst_35 : f32 to vector<16x1xf32>
    %58 = arith.divf %56, %57 : vector<16x1xf32>
    %59 = arith.mulf %52, %52 : vector<16x32xf32>
    %cst_36 = arith.constant dense<0.000000e+00> : vector<16xf32>
    %60 = vector.multi_reduction <add>, %59, %cst_36 [1] : vector<16x32xf32> to vector<16xf32>
    %61 = vector.shape_cast %60 : vector<16xf32> to vector<16x1xf32>
    %cst_37 = arith.constant 3.200000e+01 : f32
    %62 = vector.broadcast %cst_37 : f32 to vector<16x1xf32>
    %63 = arith.divf %61, %62 : vector<16x1xf32>
    %64 = arith.mulf %58, %58 : vector<16x1xf32>
    %65 = arith.subf %63, %64 : vector<16x1xf32>
    %cst_38 = arith.constant 0.000000e+00 : f32
    %66 = vector.broadcast %cst_38 : f32 to vector<16x1xf32>
    %67 = arith.maximumf %65, %66 : vector<16x1xf32>
    %68 = vector.broadcast %58 : vector<16x1xf32> to vector<16x32xf32>
    %69 = arith.subf %52, %68 : vector<16x32xf32>
    %cst_39 = arith.constant 9.99999974E-6 : f32
    %70 = vector.broadcast %cst_39 : f32 to vector<16x1xf32>
    %71 = arith.addf %67, %70 : vector<16x1xf32>
    %72 = math.rsqrt %71 : vector<16x1xf32>
    %73 = vector.broadcast %72 : vector<16x1xf32> to vector<16x32xf32>
    %74 = arith.mulf %69, %73 : vector<16x32xf32>
    %75 = vector.broadcast %53 : vector<1x32xf32> to vector<16x32xf32>
    %76 = arith.mulf %74, %75 : vector<16x32xf32>
    %77 = vector.broadcast %54 : vector<1x32xf32> to vector<16x32xf32>
    %78 = arith.addf %76, %77 : vector<16x32xf32>
    %cst_40 = arith.constant 0.000000e+00 : f32
    %79 = vector.broadcast %cst_40 : f32 to vector<16x32xf32>
    %80 = arith.maximumf %78, %79 : vector<16x32xf32>
    %c0_41 = arith.constant 0 : index
    %c0_42 = arith.constant 0 : index
    %81 = vector.load %arg13[%c0_41, %c0_42] : memref<1x32xf32, #tpu.memory_space<vmem>>, vector<1x32xf32>
    %82 = vector.broadcast %81 : vector<1x32xf32> to vector<16x32xf32>
    %83 = arith.mulf %80, %82 : vector<16x32xf32>
    %cst_43 = arith.constant dense<0.000000e+00> : vector<16xf32>
    %84 = vector.multi_reduction <add>, %83, %cst_43 [1] : vector<16x32xf32> to vector<16xf32>
    %85 = vector.shape_cast %84 : vector<16xf32> to vector<16x1xf32>
    %c0_44 = arith.constant 0 : index
    %c0_45 = arith.constant 0 : index
    %86 = vector.load %arg14[%c0_44, %c0_45] : memref<1x1xf32, #tpu.memory_space<vmem>>, vector<1x1xf32>
    %87 = vector.broadcast %86 : vector<1x1xf32> to vector<16x1xf32>
    %88 = arith.addf %85, %87 : vector<16x1xf32>
    %c0_46 = arith.constant 0 : index
    %c0_47 = arith.constant 0 : index
    %89 = vector.load %arg15[%c0_46, %c0_47] : memref<16x1xf32, #tpu.memory_space<vmem>>, vector<16x1xf32>
    tpu.vector_store %arg15[%c0_46, %c0_47], %88 {strides = array<i32>} : memref<16x1xf32, #tpu.memory_space<vmem>>, vector<16x1xf32>,
    return
  }
  func.func @transform_0(%arg0: i32) -> (i32, i32) {
    %c0_i32 = arith.constant 0 : i32
    %c0_i32_0 = arith.constant 0 : i32
    return %arg0, %c0_i32 : i32, i32
  }
  func.func @transform_1(%arg0: i32) -> (i32, i32) {
    %c0_i32 = arith.constant 0 : i32
    %c0_i32_0 = arith.constant 0 : i32
    %c0_i32_1 = arith.constant 0 : i32
    return %c0_i32, %c0_i32_0 : i32, i32
  }
  func.func @transform_2(%arg0: i32) -> (i32, i32) {
    %c0_i32 = arith.constant 0 : i32
    %c0_i32_0 = arith.constant 0 : i32
    %c0_i32_1 = arith.constant 0 : i32
    return %c0_i32, %c0_i32_0 : i32, i32
  }
  func.func @transform_3(%arg0: i32) -> (i32, i32) {
    %c0_i32 = arith.constant 0 : i32
    %c0_i32_0 = arith.constant 0 : i32
    %c0_i32_1 = arith.constant 0 : i32
    return %c0_i32, %c0_i32_0 : i32, i32
  }
  func.func @transform_4(%arg0: i32) -> (i32, i32) {
    %c0_i32 = arith.constant 0 : i32
    %c0_i32_0 = arith.constant 0 : i32
    %c0_i32_1 = arith.constant 0 : i32
    return %c0_i32, %c0_i32_0 : i32, i32
  }
  func.func @transform_5(%arg0: i32) -> (i32, i32) {
    %c0_i32 = arith.constant 0 : i32
    %c0_i32_0 = arith.constant 0 : i32
    %c0_i32_1 = arith.constant 0 : i32
    return %c0_i32, %c0_i32_0 : i32, i32
  }
  func.func @transform_6(%arg0: i32) -> (i32, i32) {
    %c0_i32 = arith.constant 0 : i32
    %c0_i32_0 = arith.constant 0 : i32
    %c0_i32_1 = arith.constant 0 : i32
    return %c0_i32, %c0_i32_0 : i32, i32
  }
  func.func @transform_7(%arg0: i32) -> (i32, i32) {
    %c0_i32 = arith.constant 0 : i32
    %c0_i32_0 = arith.constant 0 : i32
    %c0_i32_1 = arith.constant 0 : i32
    return %c0_i32, %c0_i32_0 : i32, i32
  }
  func.func @transform_8(%arg0: i32) -> (i32, i32) {
    %c0_i32 = arith.constant 0 : i32
    %c0_i32_0 = arith.constant 0 : i32
    %c0_i32_1 = arith.constant 0 : i32
    return %c0_i32, %c0_i32_0 : i32, i32
  }
  func.func @transform_9(%arg0: i32) -> (i32, i32) {
    %c0_i32 = arith.constant 0 : i32
    %c0_i32_0 = arith.constant 0 : i32
    %c0_i32_1 = arith.constant 0 : i32
    return %c0_i32, %c0_i32_0 : i32, i32
  }
  func.func @transform_10(%arg0: i32) -> (i32, i32) {
    %c0_i32 = arith.constant 0 : i32
    %c0_i32_0 = arith.constant 0 : i32
    %c0_i32_1 = arith.constant 0 : i32
    return %c0_i32, %c0_i32_0 : i32, i32
  }
  func.func @transform_11(%arg0: i32) -> (i32, i32) {
    %c0_i32 = arith.constant 0 : i32
    %c0_i32_0 = arith.constant 0 : i32
    %c0_i32_1 = arith.constant 0 : i32
    return %c0_i32, %c0_i32_0 : i32, i32
  }
  func.func @transform_12(%arg0: i32) -> (i32, i32) {
    %c0_i32 = arith.constant 0 : i32
    %c0_i32_0 = arith.constant 0 : i32
    %c0_i32_1 = arith.constant 0 : i32
    return %c0_i32, %c0_i32_0 : i32, i32
  }
  func.func @transform_13(%arg0: i32) -> (i32, i32) {
    %c0_i32 = arith.constant 0 : i32
    %c0_i32_0 = arith.constant 0 : i32
    %c0_i32_1 = arith.constant 0 : i32
    return %c0_i32, %c0_i32_0 : i32, i32
  }
  func.func @transform_14(%arg0: i32) -> (i32, i32) {
    %c0_i32 = arith.constant 0 : i32
    %c0_i32_0 = arith.constant 0 : i32
    return %arg0, %c0_i32 : i32, i32
  }
}

</mosaic_0001>

<llo_original>
// kernel: dnet_forward.1
$region0: #{dnet_forward.1}
  #allocation0 [shape = 'u32[]', space=smem, size = 0x4, offset = 0x4, fixed_abs, tag = 'smem constant byte address 0x4 - core index']
  #allocation1 [shape = 'u32[144,128]{1,0:T(1,128)}', space=vmem, size = 0x12000, scoped, tag = 'internal scratch']
  #allocation2 [shape = 'f32[1,1]{1,0:T(1,128)S(1)}', space=vmem, size = 0x200, scoped, tag = 'scoped memory for dnet_forward.1']
  %s0 = inlined_call_operand.hbm [shape: f32[2,144], index: 0, kind: input, shape index: {}]
  %s1 = inlined_call_operand.hbm [shape: bf16[144,176], index: 1, kind: input, shape index: {}]
  %s2 = inlined_call_operand.hbm [shape: f32[1,176], index: 2, kind: input, shape index: {}]
  %s3 = inlined_call_operand.hbm [shape: bf16[176,512], index: 3, kind: input, shape index: {}]
  %s4 = inlined_call_operand.hbm [shape: bf16[144,512], index: 4, kind: input, shape index: {}]
  %s5 = inlined_call_operand.hbm [shape: f32[1,512], index: 5, kind: input, shape index: {}]
  %s6 = inlined_call_operand.hbm [shape: f32[1,512], index: 6, kind: input, shape index: {}]
  %s7 = inlined_call_operand.hbm [shape: f32[1,512], index: 7, kind: input, shape index: {}]
  %s8 = inlined_call_operand.hbm [shape: bf16[512,32], index: 8, kind: input, shape index: {}]
  %s9 = inlined_call_operand.hbm [shape: f32[1,32], index: 9, kind: input, shape index: {}]
  %s10 = inlined_call_operand.hbm [shape: f32[1,32], index: 10, kind: input, shape index: {}]
  %s11 = inlined_call_operand.hbm [shape: f32[1,32], index: 11, kind: input, shape index: {}]
  %s12 = inlined_call_operand.hbm [shape: f32[1,32], index: 12, kind: input, shape index: {}]
  %s13 = inlined_call_operand.<no memory space> [shape: f32[1,1], index: 13, kind: input, shape index: {}]
  %s14 = inlined_call_operand.hbm [shape: f32[2,1], index: 14, kind: output, shape index: {}]
  %s15 = sld [smem:[#allocation0]]
  $region118: #{dnet_forward.1} parent=0
    _
  %s17 = ssub.s32 1, %s15
  %s18 = scalar_select 0, %s17, %s15
  %v19 = vstv %s13
  %20 = vst [vmem:[#allocation2] sm:$0x1] %v19
  $region1: #{dnet_forward.1} parent=0
    #allocation3 [shape = 'u8[16384]{0}', space=vmem, size = 0x4000, scoped, tag = 'input window, operand 0, single buffered']
    #allocation4 [shape = 's32[1]{0}', space=sflag, size = 0x4, scoped, tag = 'scoped memory for dnet_forward.1']
    #allocation5 [shape = 's32[1]{0}', space=sflag, size = 0x4, scoped, tag = 'scoped memory for dnet_forward.1']
    #allocation6 [shape = 'u8[73728]{0}', space=vmem, size = 0x12000, scoped, tag = 'input window, operand 1, single buffered']
    #allocation7 [shape = 's32[1]{0}', space=sflag, size = 0x4, scoped, tag = 'scoped memory for dnet_forward.1']
    #allocation8 [shape = 'u8[1024]{0}', space=vmem, size = 0x400, scoped, tag = 'input window, operand 2, single buffered']
    #allocation9 [shape = 'u8[180224]{0}', space=vmem, size = 0x2c000, scoped, tag = 'input window, operand 3, single buffered']
    #allocation10 [shape = 's32[1]{0}', space=sflag, size = 0x4, scoped, tag = 'scoped memory for dnet_forward.1']
    #allocation11 [shape = 'u8[147456]{0}', space=vmem, size = 0x24000, scoped, tag = 'input window, operand 4, single buffered']
    #allocation12 [shape = 'u8[2048]{0}', space=vmem, size = 0x800, scoped, tag = 'input window, operand 5, single buffered']
    #allocation13 [shape = 's32[1]{0}', space=sflag, size = 0x4, scoped, tag = 'scoped memory for dnet_forward.1']
    #allocation14 [shape = 'u8[2048]{0}', space=vmem, size = 0x800, scoped, tag = 'input window, operand 6, single buffered']
    #allocation15 [shape = 'u8[2048]{0}', space=vmem, size = 0x800, scoped, tag = 'input window, operand 7, single buffered']
    #allocation16 [shape = 's32[1]{0}', space=sflag, size = 0x4, scoped, tag = 'scoped memory for dnet_forward.1']
    #allocation17 [shape = 'u8[131072]{0}', space=vmem, size = 0x20000, scoped, tag = 'input window, operand 8, single buffered']
    #allocation18 [shape = 'u8[512]{0}', space=vmem, size = 0x400, scoped, tag = 'input window, operand 9, single buffered']
    #allocation19 [shape = 's32[1]{0}', space=sflag, size = 0x4, scoped, tag = 'scoped memory for dnet_forward.1']
    #allocation20 [shape = 'u8[512]{0}', space=vmem, size = 0x400, scoped, tag = 'input window, operand 10, single buffered']
    #allocation21 [shape = 'u8[512]{0}', space=vmem, size = 0x400, scoped, tag = 'input window, operand 11, single buffered']
    #allocation22 [shape = 's32[1]{0}', space=sflag, size = 0x4, scoped, tag = 'scoped memory for dnet_forward.1']
    #allocation23 [shape = 'u8[512]{0}', space=vmem, size = 0x400, scoped, tag = 'input window, operand 12, single buffered']
    #allocation24 [shape = 'u8[8192]{0}', space=vmem, size = 0x2000, scoped, tag = 'output window, operand 0, single buffered']
    %21 = vsyncpa [#allocation4], 0
    %22 = vsyncpa [#allocation7], 0
    %23 = vsyncpa [#allocation10], 0
    %24 = vsyncpa [#allocation13], 0
    %25 = vsyncpa [#allocation16], 0
    %26 = vsyncpa [#allocation19], 0
    %27 = vsyncpa [#allocation22], 0
    %28 = vsyncpa [#allocation5], 0
    // Predicated region
    $region2: #{dnet_forward.1} parent=1 // pred_check
      _
    $region3: #{dnet_forward.1} parent=1 // pred_check_branch
      %30 = sbr.rel (0) target = $region5
    $region4: #{dnet_forward.1} parent=1 // pred_region
      %s32 = ssub.s32 512, 64
      %33 = vsyncadd [#allocation4], %s32
      %s34 = sshll.u32 [#allocation3], 4
      %s35 = int_to_ptr.vmem [resolvable:$true] %s34
      %40 = dma.hbm_to_vmem [thread:$0]  %s0, 64, %s35, [#allocation4], 64, 64, 4
    $region5: #{dnet_forward.1} parent=1 // pred_fallthru
      _
    // Predicated region
    $region6: #{dnet_forward.1} parent=1 // pred_check
      _
    $region7: #{dnet_forward.1} parent=1 // pred_check_branch
      %42 = sbr.rel (0) target = $region9
    $region8: #{dnet_forward.1} parent=1 // pred_region
      %s44 = ssub.s32 2304, 2304
      %45 = vsyncadd [#allocation7], %s44
      %s46 = sshll.u32 [#allocation6], 4
      %s47 = int_to_ptr.vmem [resolvable:$true] %s46
      %52 = dma.hbm_to_vmem [thread:$0]  %s1, 2304, %s47, [#allocation7], 128, 128, 8
    $region9: #{dnet_forward.1} parent=1 // pred_fallthru
      _
    // Predicated region
    $region10: #{dnet_forward.1} parent=1 // pred_check
      _
    $region11: #{dnet_forward.1} parent=1 // pred_check_branch
      %54 = sbr.rel (0) target = $region13
    $region12: #{dnet_forward.1} parent=1 // pred_region
      %s56 = ssub.s32 32, 32
      %57 = vsyncadd [#allocation7], %s56
      %s59 = sshll.u32 [#allocation8], 4
      %s60 = int_to_ptr.vmem [resolvable:$true] %s59
      %62 = dma.hbm_to_vmem [thread:$0]  %s2, 32, %s60, [#allocation7]
    $region13: #{dnet_forward.1} parent=1 // pred_fallthru
      _
    // Predicated region
    $region14: #{dnet_forward.1} parent=1 // pred_check
      _
    $region15: #{dnet_forward.1} parent=1 // pred_check_branch
      %64 = sbr.rel (0) target = $region17
    $region16: #{dnet_forward.1} parent=1 // pred_region
      %s66 = ssub.s32 5632, 5632
      %67 = vsyncadd [#allocation10], %s66
      %s68 = sshll.u32 [#allocation9], 4
      %s69 = int_to_ptr.vmem [resolvable:$true] %s68
      %74 = dma.hbm_to_vmem [thread:$0]  %s3, 5632, %s69, [#allocation10], 256, 256, 16
    $region17: #{dnet_forward.1} parent=1 // pred_fallthru
      _
    // Predicated region
    $region18: #{dnet_forward.1} parent=1 // pred_check
      _
    $region19: #{dnet_forward.1} parent=1 // pred_check_branch
      %76 = sbr.rel (0) target = $region21
    $region20: #{dnet_forward.1} parent=1 // pred_region
      %s78 = ssub.s32 4608, 4608
      %79 = vsyncadd [#allocation10], %s78
      %s80 = sshll.u32 [#allocation11], 4
      %s81 = int_to_ptr.vmem [resolvable:$true] %s80
      %86 = dma.hbm_to_vmem [thread:$0]  %s4, 4608, %s81, [#allocation10], 256, 256, 16
    $region21: #{dnet_forward.1} parent=1 // pred_fallthru
      _
    // Predicated region
    $region22: #{dnet_forward.1} parent=1 // pred_check
      _
    $region23: #{dnet_forward.1} parent=1 // pred_check_branch
      %88 = sbr.rel (0) target = $region25
    $region24: #{dnet_forward.1} parent=1 // pred_region
      %s90 = ssub.s32 64, 64
      %91 = vsyncadd [#allocation13], %s90
      %s93 = sshll.u32 [#allocation12], 4
      %s94 = int_to_ptr.vmem [resolvable:$true] %s93
      %96 = dma.hbm_to_vmem [thread:$0]  %s5, 64, %s94, [#allocation13]
    $region25: #{dnet_forward.1} parent=1 // pred_fallthru
      _
    // Predicated region
    $region26: #{dnet_forward.1} parent=1 // pred_check
      _
    $region27: #{dnet_forward.1} parent=1 // pred_check_branch
      %98 = sbr.rel (0) target = $region29
    $region28: #{dnet_forward.1} parent=1 // pred_region
      %s100 = ssub.s32 64, 64
      %101 = vsyncadd [#allocation13], %s100
      %s103 = sshll.u32 [#allocation14], 4
      %s104 = int_to_ptr.vmem [resolvable:$true] %s103
      %106 = dma.hbm_to_vmem [thread:$0]  %s6, 64, %s104, [#allocation13]
    $region29: #{dnet_forward.1} parent=1 // pred_fallthru
      _
    // Predicated region
    $region30: #{dnet_forward.1} parent=1 // pred_check
      _
    $region31: #{dnet_forward.1} parent=1 // pred_check_branch
      %108 = sbr.rel (0) target = $region33
    $region32: #{dnet_forward.1} parent=1 // pred_region
      %s110 = ssub.s32 64, 64
      %111 = vsyncadd [#allocation16], %s110
      %s113 = sshll.u32 [#allocation15], 4
      %s114 = int_to_ptr.vmem [resolvable:$true] %s113
      %116 = dma.hbm_to_vmem [thread:$0]  %s7, 64, %s114, [#allocation16]
    $region33: #{dnet_forward.1} parent=1 // pred_fallthru
      _
    // Predicated region
    $region34: #{dnet_forward.1} parent=1 // pred_check
      _
    $region35: #{dnet_forward.1} parent=1 // pred_check_branch
      %118 = sbr.rel (0) target = $region37
    $region36: #{dnet_forward.1} parent=1 // pred_region
      %s120 = ssub.s32 4096, 4096
      %121 = vsyncadd [#allocation16], %s120
      %s122 = sshll.u32 [#allocation17], 4
      %s123 = int_to_ptr.vmem [resolvable:$true] %s122
      %128 = dma.hbm_to_vmem [thread:$0]  %s8, 4096, %s123, [#allocation16], 64, 64, 4
    $region37: #{dnet_forward.1} parent=1 // pred_fallthru
      _
    // Predicated region
    $region38: #{dnet_forward.1} parent=1 // pred_check
      _
    $region39: #{dnet_forward.1} parent=1 // pred_check_branch
      %130 = sbr.rel (0) target = $region41
    $region40: #{dnet_forward.1} parent=1 // pred_region
      %s132 = ssub.s32 16, 16
      %133 = vsyncadd [#allocation19], %s132
      %s135 = sshll.u32 [#allocation18], 4
      %s136 = int_to_ptr.vmem [resolvable:$true] %s135
      %138 = dma.hbm_to_vmem [thread:$0]  %s9, 16, %s136, [#allocation19]
    $region41: #{dnet_forward.1} parent=1 // pred_fallthru
      _
    // Predicated region
    $region42: #{dnet_forward.1} parent=1 // pred_check
      _
    $region43: #{dnet_forward.1} parent=1 // pred_check_branch
      %140 = sbr.rel (0) target = $region45
    $region44: #{dnet_forward.1} parent=1 // pred_region
      %s142 = ssub.s32 16, 16
      %143 = vsyncadd [#allocation19], %s142
      %s145 = sshll.u32 [#allocation20], 4
      %s146 = int_to_ptr.vmem [resolvable:$true] %s145
      %148 = dma.hbm_to_vmem [thread:$0]  %s10, 16, %s146, [#allocation19]
    $region45: #{dnet_forward.1} parent=1 // pred_fallthru
      _
    // Predicated region
    $region46: #{dnet_forward.1} parent=1 // pred_check
      _
    $region47: #{dnet_forward.1} parent=1 // pred_check_branch
      %150 = sbr.rel (0) target = $region49
    $region48: #{dnet_forward.1} parent=1 // pred_region
      %s152 = ssub.s32 16, 16
      %153 = vsyncadd [#allocation22], %s152
      %s155 = sshll.u32 [#allocation21], 4
      %s156 = int_to_ptr.vmem [resolvable:$true] %s155
      %158 = dma.hbm_to_vmem [thread:$0]  %s11, 16, %s156, [#allocation22]
    $region49: #{dnet_forward.1} parent=1 // pred_fallthru
      _
    // Predicated region
    $region50: #{dnet_forward.1} parent=1 // pred_check
      _
    $region51: #{dnet_forward.1} parent=1 // pred_check_branch
      %160 = sbr.rel (0) target = $region53
    $region52: #{dnet_forward.1} parent=1 // pred_region
      %s162 = ssub.s32 16, 16
      %163 = vsyncadd [#allocation22], %s162
      %s165 = sshll.u32 [#allocation23], 4
      %s166 = int_to_ptr.vmem [resolvable:$true] %s165
      %168 = dma.hbm_to_vmem [thread:$0]  %s12, 16, %s166, [#allocation22]
    $region53: #{dnet_forward.1} parent=1 // pred_fallthru
      _
    // Predicated region
    $region54: #{dnet_forward.1} parent=1 // pred_check
      _
    $region55: #{dnet_forward.1} parent=1 // pred_check_branch
      %170 = sbr.rel (0) target = $region57
    $region56: #{dnet_forward.1} parent=1 // pred_region
      _
    $region57: #{dnet_forward.1} parent=1 // pred_fallthru
      _
    // Predicated region
    $region58: #{dnet_forward.1} parent=1 // pred_check
      _
    $region59: #{dnet_forward.1} parent=1 // pred_check_branch
      %172 = sbr.rel (0) target = $region61
    $region60: #{dnet_forward.1} parent=1 // pred_region
      %173 = dma.done [#allocation4], 512
    $region61: #{dnet_forward.1} parent=1 // pred_fallthru
      _
    // Predicated region
    $region62: #{dnet_forward.1} parent=1 // pred_check
      _
    $region63: #{dnet_forward.1} parent=1 // pred_check_branch
      %175 = sbr.rel (0) target = $region65
    $region64: #{dnet_forward.1} parent=1 // pred_region
      %176 = dma.done [#allocation7], 2304
    $region65: #{dnet_forward.1} parent=1 // pred_fallthru
      _
    // Predicated region
    $region66: #{dnet_forward.1} parent=1 // pred_check
      _
    $region67: #{dnet_forward.1} parent=1 // pred_check_branch
      %178 = sbr.rel (0) target = $region69
    $region68: #{dnet_forward.1} parent=1 // pred_region
      %179 = dma.done [#allocation7], 32
    $region69: #{dnet_forward.1} parent=1 // pred_fallthru
      _
    // Predicated region
    $region70: #{dnet_forward.1} parent=1 // pred_check
      _
    $region71: #{dnet_forward.1} parent=1 // pred_check_branch
      %181 = sbr.rel (0) target = $region73
    $region72: #{dnet_forward.1} parent=1 // pred_region
      %182 = dma.done [#allocation10], 5632
    $region73: #{dnet_forward.1} parent=1 // pred_fallthru
      _
    // Predicated region
    $region74: #{dnet_forward.1} parent=1 // pred_check
      _
    $region75: #{dnet_forward.1} parent=1 // pred_check_branch
      %184 = sbr.rel (0) target = $region77
    $region76: #{dnet_forward.1} parent=1 // pred_region
      %185 = dma.done [#allocation10], 4608
    $region77: #{dnet_forward.1} parent=1 // pred_fallthru
      _
    // Predicated region
    $region78: #{dnet_forward.1} parent=1 // pred_check
      _
    $region79: #{dnet_forward.1} parent=1 // pred_check_branch
      %187 = sbr.rel (0) target = $region81
    $region80: #{dnet_forward.1} parent=1 // pred_region
      %188 = dma.done [#allocation13], 64
    $region81: #{dnet_forward.1} parent=1 // pred_fallthru
      _
    // Predicated region
    $region82: #{dnet_forward.1} parent=1 // pred_check
      _
    $region83: #{dnet_forward.1} parent=1 // pred_check_branch
      %190 = sbr.rel (0) target = $region85
    $region84: #{dnet_forward.1} parent=1 // pred_region
      %191 = dma.done [#allocation13], 64
    $region85: #{dnet_forward.1} parent=1 // pred_fallthru
      _
    // Predicated region
    $region86: #{dnet_forward.1} parent=1 // pred_check
      _
    $region87: #{dnet_forward.1} parent=1 // pred_check_branch
      %193 = sbr.rel (0) target = $region89
    $region88: #{dnet_forward.1} parent=1 // pred_region
      %194 = dma.done [#allocation16], 64
    $region89: #{dnet_forward.1} parent=1 // pred_fallthru
      _
    // Predicated region
    $region90: #{dnet_forward.1} parent=1 // pred_check
      _
    $region91: #{dnet_forward.1} parent=1 // pred_check_branch
      %196 = sbr.rel (0) target = $region93
    $region92: #{dnet_forward.1} parent=1 // pred_region
      %197 = dma.done [#allocation16], 4096
    $region93: #{dnet_forward.1} parent=1 // pred_fallthru
      _
    // Predicated region
    $region94: #{dnet_forward.1} parent=1 // pred_check
      _
    $region95: #{dnet_forward.1} parent=1 // pred_check_branch
      %199 = sbr.rel (0) target = $region97
    $region96: #{dnet_forward.1} parent=1 // pred_region
      %200 = dma.done [#allocation19], 16
    $region97: #{dnet_forward.1} parent=1 // pred_fallthru
      _
    // Predicated region
    $region98: #{dnet_forward.1} parent=1 // pred_check
      _
    $region99: #{dnet_forward.1} parent=1 // pred_check_branch
      %202 = sbr.rel (0) target = $region101
    $region100: #{dnet_forward.1} parent=1 // pred_region
      %203 = dma.done [#allocation19], 16
    $region101: #{dnet_forward.1} parent=1 // pred_fallthru
      _
    // Predicated region
    $region102: #{dnet_forward.1} parent=1 // pred_check
      _
    $region103: #{dnet_forward.1} parent=1 // pred_check_branch
      %205 = sbr.rel (0) target = $region105
    $region104: #{dnet_forward.1} parent=1 // pred_region
      %206 = dma.done [#allocation22], 16
    $region105: #{dnet_forward.1} parent=1 // pred_fallthru
      _
    // Predicated region
    $region106: #{dnet_forward.1} parent=1 // pred_check
      _
    $region107: #{dnet_forward.1} parent=1 // pred_check_branch
      %208 = sbr.rel (0) target = $region109
    $region108: #{dnet_forward.1} parent=1 // pred_region
      %209 = dma.done [#allocation22], 16
    $region109: #{dnet_forward.1} parent=1 // pred_fallthru
      _
    %v211 = vld [vmem:[#allocation3] sm:$0xf]
    %v212 = vld [vmem:[#allocation3 + $0x4] sm:$0xf]
    %v213 = vld [vmem:[#allocation3 + $0x8] sm:$0xf]
    %v214 = vld [vmem:[#allocation3 + $0xc] sm:$0xf]
    %v215 = vld [vmem:[#allocation3 + $0x10] sm:$0xf]
    %v216 = vld [vmem:[#allocation3 + $0x14] sm:$0xf]
    %v217 = vld [vmem:[#allocation3 + $0x18] sm:$0xf]
    %v218 = vld [vmem:[#allocation3 + $0x1c] sm:$0xf]
    %v219 = vld [vmem:[#allocation6] sm:$0xff]
    %v220 = vld [vmem:[#allocation6 + $0x8] sm:$0xff]
    %v221 = vld [vmem:[#allocation6 + $0x10] sm:$0xff]
    %v222 = vld [vmem:[#allocation6 + $0x18] sm:$0xff]
    %v223 = vld [vmem:[#allocation6 + $0x20] sm:$0xff]
    %v224 = vld [vmem:[#allocation6 + $0x28] sm:$0xff]
    %v225 = vld [vmem:[#allocation6 + $0x30] sm:$0xff]
    %v226 = vld [vmem:[#allocation6 + $0x38] sm:$0xff]
    %v227 = vld [vmem:[#allocation6 + $0x40] sm:$0xff]
    %v228 = vld [vmem:[#allocation6 + $0x48] sm:$0xff]
    %v229 = vld [vmem:[#allocation6 + $0x50] sm:$0xff]
    %v230 = vld [vmem:[#allocation6 + $0x58] sm:$0xff]
    %v231 = vld [vmem:[#allocation6 + $0x60] sm:$0xff]
    %v232 = vld [vmem:[#allocation6 + $0x68] sm:$0xff]
    %v233 = vld [vmem:[#allocation6 + $0x70] sm:$0xff]
    %v234 = vld [vmem:[#allocation6 + $0x78] sm:$0xff]
    %v235 = vld [vmem:[#allocation6 + $0x80] sm:$0xff]
    %v236 = vld [vmem:[#allocation6 + $0x88] sm:$0xff]
    %v245 = vcombine.low %v211, %v212
    %v246 = vcombine.low %v213, %v214
    %v248 = vunpack.c.l.s4 1983009808
    %v249 = vunpack.c.0.s8 %v248
    %v250 = vlaneseq
    %v251 = vshrl.u32 %v250, 7
    %v252 = vsub.s32 %v249, %v251
    %v253 = vrot.slane %v245, %v252
    %v255 = vunpack.c.l.s4 1983009808
    %v256 = vunpack.c.0.s8 %v255
    %v257 = vlaneseq
    %v258 = vshrl.u32 %v257, 7
    %v259 = vsub.s32 %v256, %v258
    %v260 = vrot.slane %v246, %v259
    %v261 = vcombine.low %v253, %v260
    %v262 = vcombine.high %v253, %v260
    %v263 = vcombine.low %v215, %v216
    %v264 = vcombine.low %v217, %v218
    %v266 = vunpack.c.l.s4 1983009808
    %v267 = vunpack.c.0.s8 %v266
    %v268 = vlaneseq
    %v269 = vshrl.u32 %v268, 7
    %v270 = vsub.s32 %v267, %v269
    %v271 = vrot.slane %v263, %v270
    %v273 = vunpack.c.l.s4 1983009808
    %v274 = vunpack.c.0.s8 %v273
    %v275 = vlaneseq
    %v276 = vshrl.u32 %v275, 7
    %v277 = vsub.s32 %v274, %v276
    %v278 = vrot.slane %v264, %v277
    %v279 = vcombine.low %v271, %v278
    %v280 = vcombine.high %v271, %v278
    %v285 = vpack.c.bf16 %v279, %v261
    %v286 = vpack.c.bf16 %v280, %v262
    %v287 = vld [vmem:[#allocation8] sm:$0x3]
    %v289 = vlaneseq
    %v290 = vshrl.u32 %v289, 7
    %v291 = vsub.s32 0, %v290
    %v292 = vrot.slane %v287, %v291
    %v293 = vlaneseq
    %v294 = vshrl.u32 %v293, 7
    %v295 = vsub.s32 1, %v294
    %v296 = vrot.slane %v287, %v295
    %v317 = vunpack.c.l.b16 %v219
    %v318 = vunpack.c.h.b16 %v219
    %v319 = vunpack.c.l.b16 %v220
    %v320 = vunpack.c.h.b16 %v220
    %v321 = vunpack.c.l.b16 %v221
    %v322 = vunpack.c.h.b16 %v221
    %v323 = vunpack.c.l.b16 %v222
    %v324 = vunpack.c.h.b16 %v222
    %v325 = vunpack.c.l.b16 %v223
    %v326 = vunpack.c.h.b16 %v223
    %v327 = vunpack.c.l.b16 %v224
    %v328 = vunpack.c.h.b16 %v224
    %v329 = vunpack.c.l.b16 %v225
    %v330 = vunpack.c.h.b16 %v225
    %v331 = vunpack.c.l.b16 %v226
    %v332 = vunpack.c.h.b16 %v226
    %v333 = vunpack.c.l.b16 %v227
    %v334 = vunpack.c.h.b16 %v227
    %v335 = vunpack.c.l.b16 %v228
    %v336 = vunpack.c.h.b16 %v228
    %v337 = vunpack.c.l.b16 %v229
    %v338 = vunpack.c.h.b16 %v229
    %v339 = vunpack.c.l.b16 %v230
    %v340 = vunpack.c.h.b16 %v230
    %v341 = vunpack.c.l.b16 %v231
    %v342 = vunpack.c.h.b16 %v231
    %v343 = vunpack.c.l.b16 %v232
    %v344 = vunpack.c.h.b16 %v232
    %v345 = vunpack.c.l.b16 %v233
    %v346 = vunpack.c.h.b16 %v233
    %v347 = vunpack.c.l.b16 %v234
    %v348 = vunpack.c.h.b16 %v234
    %v349 = vunpack.c.l.b16 %v235
    %v350 = vunpack.c.h.b16 %v235
    %v351 = vunpack.c.l.b16 %v236
    %v352 = vunpack.c.h.b16 %v236
    %v353 = vpack.c.b16 %v319, %v317
    %v354 = vpack.c.b16 %v320, %v318
    %v355 = vpack.c.b16 %v323, %v321
    %v356 = vpack.c.b16 %v324, %v322
    %v357 = vpack.c.b16 %v327, %v325
    %v358 = vpack.c.b16 %v328, %v326
    %v359 = vpack.c.b16 %v331, %v329
    %v360 = vpack.c.b16 %v332, %v330
    %v361 = vpack.c.b16 %v335, %v333
    %v362 = vpack.c.b16 %v336, %v334
    %v363 = vpack.c.b16 %v339, %v337
    %v364 = vpack.c.b16 %v340, %v338
    %v365 = vpack.c.b16 %v343, %v341
    %v366 = vpack.c.b16 %v344, %v342
    %v367 = vpack.c.b16 %v347, %v345
    %v368 = vpack.c.b16 %v348, %v346
    %v369 = vpack.c.b16 %v351, %v349
    %v370 = vpack.c.b16 %v352, %v350
    %vm389 = vcmask 130048
    %v391 = vsel %vm389, %v286, 0
    %393 = vmatprep.subr.bf16.mxu0 %v354
    %394 = vmatpush1.bf16.msra.mxu0 %v353
    %395 = vmatprep.subr.bf16.mxu0 %v356
    %396 = vmatpush1.bf16.msra.mxu0 %v355
    %397 = vmatprep.subr.bf16.mxu0 %v358
    %398 = vmatpush1.bf16.msra.mxu0 %v357
    %399 = vmatprep.subr.bf16.mxu0 %v360
    %400 = vmatpush1.bf16.msra.mxu0 %v359
    %401 = vmatprep.subr.bf16.mxu0 %v362
    %402 = vmatpush1.bf16.msra.mxu0 %v361
    %403 = vmatprep.subr.bf16.mxu0 %v364
    %404 = vmatpush1.bf16.msra.mxu0 %v363
    %405 = vmatprep.subr.bf16.mxu0 %v366
    %406 = vmatpush1.bf16.msra.mxu0 %v365
    %407 = vmatprep.subr.bf16.mxu0 %v368
    %408 = vmatpush1.bf16.msra.mxu0 %v367
    %409 = vmatprep.subr.bf16.mxu0 %v370
    %410 = vmatpush1.bf16.msra.mxu0 %v369
    %411 = vmatprep.subr.bf16.mxu0 0
    %412 = vmatpush1.bf16.msra.mxu0 0
    %413 = vmatprep.subr.bf16.mxu0 0
    %414 = vmatpush1.bf16.msra.mxu0 0
    %415 = vmatprep.subr.bf16.mxu0 0
    %416 = vmatpush1.bf16.msra.mxu0 0
    %417 = vmatprep.subr.bf16.mxu0 0
    %418 = vmatpush1.bf16.msra.mxu0 0
    %419 = vmatprep.subr.bf16.mxu0 0
    %420 = vmatpush1.bf16.msra.mxu0 0
    %421 = vmatprep.subr.bf16.mxu0 0
    %422 = vmatpush1.bf16.msra.mxu0 0
    %423 = vmatprep.subr.bf16.mxu0 0
    %424 = vmatpush1.bf16.msra.mxu0 0
    %425 = vmatprep.mubr.bf16.mxu0 %v391
    %426 = vmatmul.mubr.bf16.gmra.mrb[0].mxu0 %v285
    %v427 = vpop.f32.mrb[0].mxu0
    %v428 = vadd.f32 %v292, %v427
    %v429 = vpop.f32.mrb[0].mxu0
    %v430 = vadd.f32 %v296, %v429
    %v431 = vpop.f32.mrb[0].mxu0
    %v432 = vadd.f32 %v292, %v431
    %v433 = vpop.f32.mrb[0].mxu0
    %v434 = vadd.f32 %v296, %v433
    %435 = vdwg.mxu0
    %v436 = vmax.f32 %v428, 0.0
    %v437 = vmax.f32 %v430, 0.0
    %v438 = vmax.f32 %v432, 0.0
    %v439 = vmax.f32 %v434, 0.0
    %v440 = vld [vmem:[#allocation9] sm:$0xff]
    %v441 = vld [vmem:[#allocation9 + $0x8] sm:$0xff]
    %v442 = vld [vmem:[#allocation9 + $0x10] sm:$0xff]
    %v443 = vld [vmem:[#allocation9 + $0x18] sm:$0xff]
    %v444 = vld [vmem:[#allocation9 + $0x20] sm:$0xff]
    %v445 = vld [vmem:[#allocation9 + $0x28] sm:$0xff]
    %v446 = vld [vmem:[#allocation9 + $0x30] sm:$0xff]
    %v447 = vld [vmem:[#allocation9 + $0x38] sm:$0xff]
    %v448 = vld [vmem:[#allocation9 + $0x40] sm:$0xff]
    %v449 = vld [vmem:[#allocation9 + $0x48] sm:$0xff]
    %v450 = vld [vmem:[#allocation9 + $0x50] sm:$0xff]
    %v451 = vld [vmem:[#allocation9 + $0x58] sm:$0xff]
    %v452 = vld [vmem:[#allocation9 + $0x60] sm:$0xff]
    %v453 = vld [vmem:[#allocation9 + $0x68] sm:$0xff]
    %v454 = vld [vmem:[#allocation9 + $0x70] sm:$0xff]
    %v455 = vld [vmem:[#allocation9 + $0x78] sm:$0xff]
    %v456 = vld [vmem:[#allocation9 + $0x80] sm:$0xff]
    %v457 = vld [vmem:[#allocation9 + $0x88] sm:$0xff]
    %v458 = vld [vmem:[#allocation9 + $0x90] sm:$0xff]
    %v459 = vld [vmem:[#allocation9 + $0x98] sm:$0xff]
    %v460 = vld [vmem:[#allocation9 + $0xa0] sm:$0xff]
    %v461 = vld [vmem:[#allocation9 + $0xa8] sm:$0xff]
    %v462 = vld [vmem:[#allocation9 + $0xb0] sm:$0xff]
    %v463 = vld [vmem:[#allocation9 + $0xb8] sm:$0xff]
    %v464 = vld [vmem:[#allocation9 + $0xc0] sm:$0xff]
    %v465 = vld [vmem:[#allocation9 + $0xc8] sm:$0xff]
    %v466 = vld [vmem:[#allocation9 + $0xd0] sm:$0xff]
    %v467 = vld [vmem:[#allocation9 + $0xd8] sm:$0xff]
    %v468 = vld [vmem:[#allocation9 + $0xe0] sm:$0xff]
    %v469 = vld [vmem:[#allocation9 + $0xe8] sm:$0xff]
    %v470 = vld [vmem:[#allocation9 + $0xf0] sm:$0xff]
    %v471 = vld [vmem:[#allocation9 + $0xf8] sm:$0xff]
    %v472 = vld [vmem:[#allocation9 + $0x100] sm:$0xff]
    %v473 = vld [vmem:[#allocation9 + $0x108] sm:$0xff]
    %v474 = vld [vmem:[#allocation9 + $0x110] sm:$0xff]
    %v475 = vld [vmem:[#allocation9 + $0x118] sm:$0xff]
    %v476 = vld [vmem:[#allocation9 + $0x120] sm:$0xff]
    %v477 = vld [vmem:[#allocation9 + $0x128] sm:$0xff]
    %v478 = vld [vmem:[#allocation9 + $0x130] sm:$0xff]
    %v479 = vld [vmem:[#allocation9 + $0x138] sm:$0xff]
    %v480 = vld [vmem:[#allocation9 + $0x140] sm:$0xff]
    %v481 = vld [vmem:[#allocation9 + $0x148] sm:$0xff]
    %v482 = vld [vmem:[#allocation9 + $0x150] sm:$0xff]
    %v483 = vld [vmem:[#allocation9 + $0x158] sm:$0xff]
    %v484 = vpack.c.bf16 %v438, %v436
    %v485 = vpack.c.bf16 %v439, %v437
    %v486 = vld [vmem:[#allocation11] sm:$0xff]
    %v487 = vld [vmem:[#allocation11 + $0x8] sm:$0xff]
    %v488 = vld [vmem:[#allocation11 + $0x10] sm:$0xff]
    %v489 = vld [vmem:[#allocation11 + $0x18] sm:$0xff]
    %v490 = vld [vmem:[#allocation11 + $0x20] sm:$0xff]
    %v491 = vld [vmem:[#allocation11 + $0x28] sm:$0xff]
    %v492 = vld [vmem:[#allocation11 + $0x30] sm:$0xff]
    %v493 = vld [vmem:[#allocation11 + $0x38] sm:$0xff]
    %v494 = vld [vmem:[#allocation11 + $0x40] sm:$0xff]
    %v495 = vld [vmem:[#allocation11 + $0x48] sm:$0xff]
    %v496 = vld [vmem:[#allocation11 + $0x50] sm:$0xff]
    %v497 = vld [vmem:[#allocation11 + $0x58] sm:$0xff]
    %v498 = vld [vmem:[#allocation11 + $0x60] sm:$0xff]
    %v499 = vld [vmem:[#allocation11 + $0x68] sm:$0xff]
    %v500 = vld [vmem:[#allocation11 + $0x70] sm:$0xff]
    %v501 = vld [vmem:[#allocation11 + $0x78] sm:$0xff]
    %v502 = vld [vmem:[#allocation11 + $0x80] sm:$0xff]
    %v503 = vld [vmem:[#allocation11 + $0x88] sm:$0xff]
    %v504 = vld [vmem:[#allocation11 + $0x90] sm:$0xff]
    %v505 = vld [vmem:[#allocation11 + $0x98] sm:$0xff]
    %v506 = vld [vmem:[#allocation11 + $0xa0] sm:$0xff]
    %v507 = vld [vmem:[#allocation11 + $0xa8] sm:$0xff]
    %v508 = vld [vmem:[#allocation11 + $0xb0] sm:$0xff]
    %v509 = vld [vmem:[#allocation11 + $0xb8] sm:$0xff]
    %v510 = vld [vmem:[#allocation11 + $0xc0] sm:$0xff]
    %v511 = vld [vmem:[#allocation11 + $0xc8] sm:$0xff]
    %v512 = vld [vmem:[#allocation11 + $0xd0] sm:$0xff]
    %v513 = vld [vmem:[#allocation11 + $0xd8] sm:$0xff]
    %v514 = vld [vmem:[#allocation11 + $0xe0] sm:$0xff]
    %v515 = vld [vmem:[#allocation11 + $0xe8] sm:$0xff]
    %v516 = vld [vmem:[#allocation11 + $0xf0] sm:$0xff]
    %v517 = vld [vmem:[#allocation11 + $0xf8] sm:$0xff]
    %v518 = vld [vmem:[#allocation11 + $0x100] sm:$0xff]
    %v519 = vld [vmem:[#allocation11 + $0x108] sm:$0xff]
    %v520 = vld [vmem:[#allocation11 + $0x110] sm:$0xff]
    %v521 = vld [vmem:[#allocation11 + $0x118] sm:$0xff]
    %v558 = vunpack.c.l.b16 %v486
    %v559 = vunpack.c.h.b16 %v486
    %v560 = vunpack.c.l.b16 %v487
    %v561 = vunpack.c.h.b16 %v487
    %v562 = vunpack.c.l.b16 %v488
    %v563 = vunpack.c.h.b16 %v488
    %v564 = vunpack.c.l.b16 %v489
    %v565 = vunpack.c.h.b16 %v489
    %v566 = vunpack.c.l.b16 %v490
    %v567 = vunpack.c.h.b16 %v490
    %v568 = vunpack.c.l.b16 %v491
    %v569 = vunpack.c.h.b16 %v491
    %v570 = vunpack.c.l.b16 %v492
    %v571 = vunpack.c.h.b16 %v492
    %v572 = vunpack.c.l.b16 %v493
    %v573 = vunpack.c.h.b16 %v493
    %v574 = vunpack.c.l.b16 %v494
    %v575 = vunpack.c.h.b16 %v494
    %v576 = vunpack.c.l.b16 %v495
    %v577 = vunpack.c.h.b16 %v495
    %v578 = vunpack.c.l.b16 %v496
    %v579 = vunpack.c.h.b16 %v496
    %v580 = vunpack.c.l.b16 %v497
    %v581 = vunpack.c.h.b16 %v497
    %v582 = vunpack.c.l.b16 %v498
    %v583 = vunpack.c.h.b16 %v498
    %v584 = vunpack.c.l.b16 %v499
    %v585 = vunpack.c.h.b16 %v499
    %v586 = vunpack.c.l.b16 %v500
    %v587 = vunpack.c.h.b16 %v500
    %v588 = vunpack.c.l.b16 %v501
    %v589 = vunpack.c.h.b16 %v501
    %v590 = vunpack.c.l.b16 %v502
    %v591 = vunpack.c.h.b16 %v502
    %v592 = vunpack.c.l.b16 %v503
    %v593 = vunpack.c.h.b16 %v503
    %v594 = vunpack.c.l.b16 %v504
    %v595 = vunpack.c.h.b16 %v504
    %v596 = vunpack.c.l.b16 %v505
    %v597 = vunpack.c.h.b16 %v505
    %v598 = vunpack.c.l.b16 %v506
    %v599 = vunpack.c.h.b16 %v506
    %v600 = vunpack.c.l.b16 %v507
    %v601 = vunpack.c.h.b16 %v507
    %v602 = vunpack.c.l.b16 %v508
    %v603 = vunpack.c.h.b16 %v508
    %v604 = vunpack.c.l.b16 %v509
    %v605 = vunpack.c.h.b16 %v509
    %v606 = vunpack.c.l.b16 %v510
    %v607 = vunpack.c.h.b16 %v510
    %v608 = vunpack.c.l.b16 %v511
    %v609 = vunpack.c.h.b16 %v511
    %v610 = vunpack.c.l.b16 %v512
    %v611 = vunpack.c.h.b16 %v512
    %v612 = vunpack.c.l.b16 %v513
    %v613 = vunpack.c.h.b16 %v513
    %v614 = vunpack.c.l.b16 %v514
    %v615 = vunpack.c.h.b16 %v514
    %v616 = vunpack.c.l.b16 %v515
    %v617 = vunpack.c.h.b16 %v515
    %v618 = vunpack.c.l.b16 %v516
    %v619 = vunpack.c.h.b16 %v516
    %v620 = vunpack.c.l.b16 %v517
    %v621 = vunpack.c.h.b16 %v517
    %v622 = vunpack.c.l.b16 %v518
    %v623 = vunpack.c.h.b16 %v518
    %v624 = vunpack.c.l.b16 %v519
    %v625 = vunpack.c.h.b16 %v519
    %v626 = vunpack.c.l.b16 %v520
    %v627 = vunpack.c.h.b16 %v520
    %v628 = vunpack.c.l.b16 %v521
    %v629 = vunpack.c.h.b16 %v521
    %v630 = vpack.c.b16 %v562, %v558
    %v631 = vpack.c.b16 %v563, %v559
    %v632 = vpack.c.b16 %v564, %v560
    %v633 = vpack.c.b16 %v565, %v561
    %v634 = vpack.c.b16 %v570, %v566
    %v635 = vpack.c.b16 %v571, %v567
    %v636 = vpack.c.b16 %v572, %v568
    %v637 = vpack.c.b16 %v573, %v569
    %v638 = vpack.c.b16 %v578, %v574
    %v639 = vpack.c.b16 %v579, %v575
    %v640 = vpack.c.b16 %v580, %v576
    %v641 = vpack.c.b16 %v581, %v577
    %v642 = vpack.c.b16 %v586, %v582
    %v643 = vpack.c.b16 %v587, %v583
    %v644 = vpack.c.b16 %v588, %v584
    %v645 = vpack.c.b16 %v589, %v585
    %v646 = vpack.c.b16 %v594, %v590
    %v647 = vpack.c.b16 %v595, %v591
    %v648 = vpack.c.b16 %v596, %v592
    %v649 = vpack.c.b16 %v597, %v593
    %v650 = vpack.c.b16 %v602, %v598
    %v651 = vpack.c.b16 %v603, %v599
    %v652 = vpack.c.b16 %v604, %v600
    %v653 = vpack.c.b16 %v605, %v601
    %v654 = vpack.c.b16 %v610, %v606
    %v655 = vpack.c.b16 %v611, %v607
    %v656 = vpack.c.b16 %v612, %v608
    %v657 = vpack.c.b16 %v613, %v609
    %v658 = vpack.c.b16 %v618, %v614
    %v659 = vpack.c.b16 %v619, %v615
    %v660 = vpack.c.b16 %v620, %v616
    %v661 = vpack.c.b16 %v621, %v617
    %v662 = vpack.c.b16 %v626, %v622
    %v663 = vpack.c.b16 %v627, %v623
    %v664 = vpack.c.b16 %v628, %v624
    %v665 = vpack.c.b16 %v629, %v625
    %702 = vmatprep.subr.bf16.mxu0 %v631
    %703 = vmatpush1.bf16.msra.mxu0 %v630
    %704 = vmatprep.subr.bf16.mxu0 %v635
    %705 = vmatpush1.bf16.msra.mxu0 %v634
    %706 = vmatprep.subr.bf16.mxu0 %v639
    %707 = vmatpush1.bf16.msra.mxu0 %v638
    %708 = vmatprep.subr.bf16.mxu0 %v643
    %709 = vmatpush1.bf16.msra.mxu0 %v642
    %710 = vmatprep.subr.bf16.mxu0 %v647
    %711 = vmatpush1.bf16.msra.mxu0 %v646
    %712 = vmatprep.subr.bf16.mxu0 %v651
    %713 = vmatpush1.bf16.msra.mxu0 %v650
    %714 = vmatprep.subr.bf16.mxu0 %v655
    %715 = vmatpush1.bf16.msra.mxu0 %v654
    %716 = vmatprep.subr.bf16.mxu0 %v659
    %717 = vmatpush1.bf16.msra.mxu0 %v658
    %718 = vmatprep.subr.bf16.mxu0 %v663
    %719 = vmatpush1.bf16.msra.mxu0 %v662
    %720 = vmatprep.subr.bf16.mxu0 0
    %721 = vmatpush1.bf16.msra.mxu0 0
    %722 = vmatprep.subr.bf16.mxu0 0
    %723 = vmatpush1.bf16.msra.mxu0 0
    %724 = vmatprep.subr.bf16.mxu0 0
    %725 = vmatpush1.bf16.msra.mxu0 0
    %726 = vmatprep.subr.bf16.mxu0 0
    %727 = vmatpush1.bf16.msra.mxu0 0
    %728 = vmatprep.subr.bf16.mxu0 0
    %729 = vmatpush1.bf16.msra.mxu0 0
    %730 = vmatprep.subr.bf16.mxu0 0
    %731 = vmatpush1.bf16.msra.mxu0 0
    %732 = vmatprep.subr.bf16.mxu0 0
    %733 = vmatpush1.bf16.msra.mxu0 0
    %734 = vmatprep.mubr.bf16.mxu0 %v391
    %735 = vmatmul.mubr.bf16.gmra.mrb[0].mxu0 %v285
    %v736 = vpop.f32.mrb[0].mxu0
    %v737 = vadd.f32 0.0, %v736
    %v738 = vpop.f32.mrb[0].mxu0
    %v739 = vadd.f32 0.0, %v738
    %v740 = vpop.f32.mrb[0].mxu0
    %v741 = vadd.f32 0.0, %v740
    %v742 = vpop.f32.mrb[0].mxu0
    %v743 = vadd.f32 0.0, %v742
    %744 = vdwg.mxu0
    %745 = vmatprep.subr.bf16.mxu0 %v633
    %746 = vmatpush1.bf16.msra.mxu0 %v632
    %747 = vmatprep.subr.bf16.mxu0 %v637
    %748 = vmatpush1.bf16.msra.mxu0 %v636
    %749 = vmatprep.subr.bf16.mxu0 %v641
    %750 = vmatpush1.bf16.msra.mxu0 %v640
    %751 = vmatprep.subr.bf16.mxu0 %v645
    %752 = vmatpush1.bf16.msra.mxu0 %v644
    %753 = vmatprep.subr.bf16.mxu0 %v649
    %754 = vmatpush1.bf16.msra.mxu0 %v648
    %755 = vmatprep.subr.bf16.mxu0 %v653
    %756 = vmatpush1.bf16.msra.mxu0 %v652
    %757 = vmatprep.subr.bf16.mxu0 %v657
    %758 = vmatpush1.bf16.msra.mxu0 %v656
    %759 = vmatprep.subr.bf16.mxu0 %v661
    %760 = vmatpush1.bf16.msra.mxu0 %v660
    %761 = vmatprep.subr.bf16.mxu0 %v665
    %762 = vmatpush1.bf16.msra.mxu0 %v664
    %763 = vmatprep.subr.bf16.mxu0 0
    %764 = vmatpush1.bf16.msra.mxu0 0
    %765 = vmatprep.subr.bf16.mxu0 0
    %766 = vmatpush1.bf16.msra.mxu0 0
    %767 = vmatprep.subr.bf16.mxu0 0
    %768 = vmatpush1.bf16.msra.mxu0 0
    %769 = vmatprep.subr.bf16.mxu0 0
    %770 = vmatpush1.bf16.msra.mxu0 0
    %771 = vmatprep.subr.bf16.mxu0 0
    %772 = vmatpush1.bf16.msra.mxu0 0
    %773 = vmatprep.subr.bf16.mxu0 0
    %774 = vmatpush1.bf16.msra.mxu0 0
    %775 = vmatprep.subr.bf16.mxu0 0
    %776 = vmatpush1.bf16.msra.mxu0 0
    %777 = vmatprep.mubr.bf16.mxu0 %v391
    %778 = vmatmul.mubr.bf16.gmra.mrb[0].mxu0 %v285
    %v779 = vpop.f32.mrb[0].mxu0
    %v780 = vadd.f32 0.0, %v779
    %v781 = vpop.f32.mrb[0].mxu0
    %v782 = vadd.f32 0.0, %v781
    %v783 = vpop.f32.mrb[0].mxu0
    %v784 = vadd.f32 0.0, %v783
    %v785 = vpop.f32.mrb[0].mxu0
    %v786 = vadd.f32 0.0, %v785
    %787 = vdwg.mxu0
    %v832 = vunpack.c.l.b16 %v440
    %v833 = vunpack.c.h.b16 %v440
    %v834 = vunpack.c.l.b16 %v441
    %v835 = vunpack.c.h.b16 %v441
    %v836 = vunpack.c.l.b16 %v442
    %v837 = vunpack.c.h.b16 %v442
    %v838 = vunpack.c.l.b16 %v443
    %v839 = vunpack.c.h.b16 %v443
    %v840 = vunpack.c.l.b16 %v444
    %v841 = vunpack.c.h.b16 %v444
    %v842 = vunpack.c.l.b16 %v445
    %v843 = vunpack.c.h.b16 %v445
    %v844 = vunpack.c.l.b16 %v446
    %v845 = vunpack.c.h.b16 %v446
    %v846 = vunpack.c.l.b16 %v447
    %v847 = vunpack.c.h.b16 %v447
    %v848 = vunpack.c.l.b16 %v448
    %v849 = vunpack.c.h.b16 %v448
    %v850 = vunpack.c.l.b16 %v449
    %v851 = vunpack.c.h.b16 %v449
    %v852 = vunpack.c.l.b16 %v450
    %v853 = vunpack.c.h.b16 %v450
    %v854 = vunpack.c.l.b16 %v451
    %v855 = vunpack.c.h.b16 %v451
    %v856 = vunpack.c.l.b16 %v452
    %v857 = vunpack.c.h.b16 %v452
    %v858 = vunpack.c.l.b16 %v453
    %v859 = vunpack.c.h.b16 %v453
    %v860 = vunpack.c.l.b16 %v454
    %v861 = vunpack.c.h.b16 %v454
    %v862 = vunpack.c.l.b16 %v455
    %v863 = vunpack.c.h.b16 %v455
    %v864 = vunpack.c.l.b16 %v456
    %v865 = vunpack.c.h.b16 %v456
    %v866 = vunpack.c.l.b16 %v457
    %v867 = vunpack.c.h.b16 %v457
    %v868 = vunpack.c.l.b16 %v458
    %v869 = vunpack.c.h.b16 %v458
    %v870 = vunpack.c.l.b16 %v459
    %v871 = vunpack.c.h.b16 %v459
    %v872 = vunpack.c.l.b16 %v460
    %v873 = vunpack.c.h.b16 %v460
    %v874 = vunpack.c.l.b16 %v461
    %v875 = vunpack.c.h.b16 %v461
    %v876 = vunpack.c.l.b16 %v462
    %v877 = vunpack.c.h.b16 %v462
    %v878 = vunpack.c.l.b16 %v463
    %v879 = vunpack.c.h.b16 %v463
    %v880 = vunpack.c.l.b16 %v464
    %v881 = vunpack.c.h.b16 %v464
    %v882 = vunpack.c.l.b16 %v465
    %v883 = vunpack.c.h.b16 %v465
    %v884 = vunpack.c.l.b16 %v466
    %v885 = vunpack.c.h.b16 %v466
    %v886 = vunpack.c.l.b16 %v467
    %v887 = vunpack.c.h.b16 %v467
    %v888 = vunpack.c.l.b16 %v468
    %v889 = vunpack.c.h.b16 %v468
    %v890 = vunpack.c.l.b16 %v469
    %v891 = vunpack.c.h.b16 %v469
    %v892 = vunpack.c.l.b16 %v470
    %v893 = vunpack.c.h.b16 %v470
    %v894 = vunpack.c.l.b16 %v471
    %v895 = vunpack.c.h.b16 %v471
    %v896 = vunpack.c.l.b16 %v472
    %v897 = vunpack.c.h.b16 %v472
    %v898 = vunpack.c.l.b16 %v473
    %v899 = vunpack.c.h.b16 %v473
    %v900 = vunpack.c.l.b16 %v474
    %v901 = vunpack.c.h.b16 %v474
    %v902 = vunpack.c.l.b16 %v475
    %v903 = vunpack.c.h.b16 %v475
    %v904 = vunpack.c.l.b16 %v476
    %v905 = vunpack.c.h.b16 %v476
    %v906 = vunpack.c.l.b16 %v477
    %v907 = vunpack.c.h.b16 %v477
    %v908 = vunpack.c.l.b16 %v478
    %v909 = vunpack.c.h.b16 %v478
    %v910 = vunpack.c.l.b16 %v479
    %v911 = vunpack.c.h.b16 %v479
    %v912 = vunpack.c.l.b16 %v480
    %v913 = vunpack.c.h.b16 %v480
    %v914 = vunpack.c.l.b16 %v481
    %v915 = vunpack.c.h.b16 %v481
    %v916 = vunpack.c.l.b16 %v482
    %v917 = vunpack.c.h.b16 %v482
    %v918 = vunpack.c.l.b16 %v483
    %v919 = vunpack.c.h.b16 %v483
    %v920 = vpack.c.b16 %v836, %v832
    %v921 = vpack.c.b16 %v837, %v833
    %v922 = vpack.c.b16 %v838, %v834
    %v923 = vpack.c.b16 %v839, %v835
    %v924 = vpack.c.b16 %v844, %v840
    %v925 = vpack.c.b16 %v845, %v841
    %v926 = vpack.c.b16 %v846, %v842
    %v927 = vpack.c.b16 %v847, %v843
    %v928 = vpack.c.b16 %v852, %v848
    %v929 = vpack.c.b16 %v853, %v849
    %v930 = vpack.c.b16 %v854, %v850
    %v931 = vpack.c.b16 %v855, %v851
    %v932 = vpack.c.b16 %v860, %v856
    %v933 = vpack.c.b16 %v861, %v857
    %v934 = vpack.c.b16 %v862, %v858
    %v935 = vpack.c.b16 %v863, %v859
    %v936 = vpack.c.b16 %v868, %v864
    %v937 = vpack.c.b16 %v869, %v865
    %v938 = vpack.c.b16 %v870, %v866
    %v939 = vpack.c.b16 %v871, %v867
    %v940 = vpack.c.b16 %v876, %v872
    %v941 = vpack.c.b16 %v877, %v873
    %v942 = vpack.c.b16 %v878, %v874
    %v943 = vpack.c.b16 %v879, %v875
    %v944 = vpack.c.b16 %v884, %v880
    %v945 = vpack.c.b16 %v885, %v881
    %v946 = vpack.c.b16 %v886, %v882
    %v947 = vpack.c.b16 %v887, %v883
    %v948 = vpack.c.b16 %v892, %v888
    %v949 = vpack.c.b16 %v893, %v889
    %v950 = vpack.c.b16 %v894, %v890
    %v951 = vpack.c.b16 %v895, %v891
    %v952 = vpack.c.b16 %v900, %v896
    %v953 = vpack.c.b16 %v901, %v897
    %v954 = vpack.c.b16 %v902, %v898
    %v955 = vpack.c.b16 %v903, %v899
    %v956 = vpack.c.b16 %v908, %v904
    %v957 = vpack.c.b16 %v909, %v905
    %v958 = vpack.c.b16 %v910, %v906
    %v959 = vpack.c.b16 %v911, %v907
    %v960 = vpack.c.b16 %v916, %v912
    %v961 = vpack.c.b16 %v917, %v913
    %v962 = vpack.c.b16 %v918, %v914
    %v963 = vpack.c.b16 %v919, %v915
    %vm1008 = vcmask 392192
    %v1010 = vsel %vm1008, %v485, 0
    %1012 = vmatprep.subr.bf16.mxu0 %v921
    %1013 = vmatpush1.bf16.msra.mxu0 %v920
    %1014 = vmatprep.subr.bf16.mxu0 %v925
    %1015 = vmatpush1.bf16.msra.mxu0 %v924
    %1016 = vmatprep.subr.bf16.mxu0 %v929
    %1017 = vmatpush1.bf16.msra.mxu0 %v928
    %1018 = vmatprep.subr.bf16.mxu0 %v933
    %1019 = vmatpush1.bf16.msra.mxu0 %v932
    %1020 = vmatprep.subr.bf16.mxu0 %v937
    %1021 = vmatpush1.bf16.msra.mxu0 %v936
    %1022 = vmatprep.subr.bf16.mxu0 %v941
    %1023 = vmatpush1.bf16.msra.mxu0 %v940
    %1024 = vmatprep.subr.bf16.mxu0 %v945
    %1025 = vmatpush1.bf16.msra.mxu0 %v944
    %1026 = vmatprep.subr.bf16.mxu0 %v949
    %1027 = vmatpush1.bf16.msra.mxu0 %v948
    %1028 = vmatprep.subr.bf16.mxu0 %v953
    %1029 = vmatpush1.bf16.msra.mxu0 %v952
    %1030 = vmatprep.subr.bf16.mxu0 %v957
    %1031 = vmatpush1.bf16.msra.mxu0 %v956
    %1032 = vmatprep.subr.bf16.mxu0 %v961
    %1033 = vmatpush1.bf16.msra.mxu0 %v960
    %1034 = vmatprep.subr.bf16.mxu0 0
    %1035 = vmatpush1.bf16.msra.mxu0 0
    %1036 = vmatprep.subr.bf16.mxu0 0
    %1037 = vmatpush1.bf16.msra.mxu0 0
    %1038 = vmatprep.subr.bf16.mxu0 0
    %1039 = vmatpush1.bf16.msra.mxu0 0
    %1040 = vmatprep.subr.bf16.mxu0 0
    %1041 = vmatpush1.bf16.msra.mxu0 0
    %1042 = vmatprep.subr.bf16.mxu0 0
    %1043 = vmatpush1.bf16.msra.mxu0 0
    %1044 = vmatprep.mubr.bf16.mxu0 %v1010
    %1045 = vmatmul.mubr.bf16.gmra.mrb[0].mxu0 %v484
    %v1046 = vpop.f32.mrb[0].mxu0
    %v1047 = vadd.f32 %v737, %v1046
    %v1048 = vpop.f32.mrb[0].mxu0
    %v1049 = vadd.f32 %v739, %v1048
    %v1050 = vpop.f32.mrb[0].mxu0
    %v1051 = vadd.f32 %v741, %v1050
    %v1052 = vpop.f32.mrb[0].mxu0
    %v1053 = vadd.f32 %v743, %v1052
    %1054 = vdwg.mxu0
    %1055 = vmatprep.subr.bf16.mxu0 %v923
    %1056 = vmatpush1.bf16.msra.mxu0 %v922
    %1057 = vmatprep.subr.bf16.mxu0 %v927
    %1058 = vmatpush1.bf16.msra.mxu0 %v926
    %1059 = vmatprep.subr.bf16.mxu0 %v931
    %1060 = vmatpush1.bf16.msra.mxu0 %v930
    %1061 = vmatprep.subr.bf16.mxu0 %v935
    %1062 = vmatpush1.bf16.msra.mxu0 %v934
    %1063 = vmatprep.subr.bf16.mxu0 %v939
    %1064 = vmatpush1.bf16.msra.mxu0 %v938
    %1065 = vmatprep.subr.bf16.mxu0 %v943
    %1066 = vmatpush1.bf16.msra.mxu0 %v942
    %1067 = vmatprep.subr.bf16.mxu0 %v947
    %1068 = vmatpush1.bf16.msra.mxu0 %v946
    %1069 = vmatprep.subr.bf16.mxu0 %v951
    %1070 = vmatpush1.bf16.msra.mxu0 %v950
    %1071 = vmatprep.subr.bf16.mxu0 %v955
    %1072 = vmatpush1.bf16.msra.mxu0 %v954
    %1073 = vmatprep.subr.bf16.mxu0 %v959
    %1074 = vmatpush1.bf16.msra.mxu0 %v958
    %1075 = vmatprep.subr.bf16.mxu0 %v963
    %1076 = vmatpush1.bf16.msra.mxu0 %v962
    %1077 = vmatprep.subr.bf16.mxu0 0
    %1078 = vmatpush1.bf16.msra.mxu0 0
    %1079 = vmatprep.subr.bf16.mxu0 0
    %1080 = vmatpush1.bf16.msra.mxu0 0
    %1081 = vmatprep.subr.bf16.mxu0 0
    %1082 = vmatpush1.bf16.msra.mxu0 0
    %1083 = vmatprep.subr.bf16.mxu0 0
    %1084 = vmatpush1.bf16.msra.mxu0 0
    %1085 = vmatprep.subr.bf16.mxu0 0
    %1086 = vmatpush1.bf16.msra.mxu0 0
    %1087 = vmatprep.mubr.bf16.mxu0 %v1010
    %1088 = vmatmul.mubr.bf16.gmra.mrb[0].mxu0 %v484
    %v1089 = vpop.f32.mrb[0].mxu0
    %v1090 = vadd.f32 %v780, %v1089
    %v1091 = vpop.f32.mrb[0].mxu0
    %v1092 = vadd.f32 %v782, %v1091
    %v1093 = vpop.f32.mrb[0].mxu0
    %v1094 = vadd.f32 %v784, %v1093
    %v1095 = vpop.f32.mrb[0].mxu0
    %v1096 = vadd.f32 %v786, %v1095
    %1097 = vdwg.mxu0
    %v1098 = vld [vmem:[#allocation12] sm:$0xf]
    %v1100 = vlaneseq
    %v1101 = vshrl.u32 %v1100, 7
    %v1102 = vsub.s32 0, %v1101
    %v1103 = vrot.slane %v1098, %v1102
    %v1104 = vlaneseq
    %v1105 = vshrl.u32 %v1104, 7
    %v1106 = vsub.s32 1, %v1105
    %v1107 = vrot.slane %v1098, %v1106
    %v1108 = vlaneseq
    %v1109 = vshrl.u32 %v1108, 7
    %v1110 = vsub.s32 2, %v1109
    %v1111 = vrot.slane %v1098, %v1110
    %v1112 = vlaneseq
    %v1113 = vshrl.u32 %v1112, 7
    %v1114 = vsub.s32 3, %v1113
    %v1115 = vrot.slane %v1098, %v1114
    %v1120 = vadd.f32 %v1047, %v1103
    %v1121 = vadd.f32 %v1049, %v1107
    %v1122 = vadd.f32 %v1090, %v1111
    %v1123 = vadd.f32 %v1092, %v1115
    %v1124 = vadd.f32 %v1051, %v1103
    %v1125 = vadd.f32 %v1053, %v1107
    %v1126 = vadd.f32 %v1094, %v1111
    %v1127 = vadd.f32 %v1096, %v1115
    %v1128 = vld [vmem:[#allocation14] sm:$0xf]
    %v1129 = vld [vmem:[#allocation15] sm:$0xf]
    %v1130 = vadd.f32 %v1120, %v1121
    %v1131 = vadd.f32 %v1130, %v1122
    %v1132 = vadd.f32 %v1131, %v1123
    %1133 = vadd.xlane.f32.xlu0 %v1132
    %v1134 = vpop.xlane.xlu0 %1133
    %v1135 = vadd.f32 %v1124, %v1125
    %v1136 = vadd.f32 %v1135, %v1126
    %v1137 = vadd.f32 %v1136, %v1127
    %1138 = vadd.xlane.f32.xlu0 %v1137
    %v1139 = vpop.xlane.xlu0 %1138
    %v1140 = vrcp.pop 512.0
    %v1141 = vmul.f32 %v1134, %v1140
    %v1142 = vmul.f32 %v1139, %v1140
    %v1143 = vmul.f32 %v1120, %v1120
    %v1144 = vmul.f32 %v1121, %v1121
    %v1145 = vmul.f32 %v1122, %v1122
    %v1146 = vmul.f32 %v1123, %v1123
    %v1147 = vmul.f32 %v1124, %v1124
    %v1148 = vmul.f32 %v1125, %v1125
    %v1149 = vmul.f32 %v1126, %v1126
    %v1150 = vmul.f32 %v1127, %v1127
    %v1151 = vadd.f32 %v1143, %v1144
    %v1152 = vadd.f32 %v1151, %v1145
    %v1153 = vadd.f32 %v1152, %v1146
    %1154 = vadd.xlane.f32.xlu0 %v1153
    %v1155 = vpop.xlane.xlu0 %1154
    %v1156 = vadd.f32 %v1147, %v1148
    %v1157 = vadd.f32 %v1156, %v1149
    %v1158 = vadd.f32 %v1157, %v1150
    %1159 = vadd.xlane.f32.xlu0 %v1158
    %v1160 = vpop.xlane.xlu0 %1159
    %v1161 = vmul.f32 %v1155, %v1140
    %v1162 = vmul.f32 %v1160, %v1140
    %v1163 = vmul.f32 %v1141, %v1141
    %v1164 = vmul.f32 %v1142, %v1142
    %v1165 = vsub.f32 %v1161, %v1163
    %v1166 = vsub.f32 %v1162, %v1164
    %v1167 = vmax.f32 %v1165, 0.0
    %v1168 = vmax.f32 %v1166, 0.0
    %v1169 = vsub.f32 %v1120, %v1141
    %v1170 = vsub.f32 %v1121, %v1141
    %v1171 = vsub.f32 %v1122, %v1141
    %v1172 = vsub.f32 %v1123, %v1141
    %v1173 = vsub.f32 %v1124, %v1142
    %v1174 = vsub.f32 %v1125, %v1142
    %v1175 = vsub.f32 %v1126, %v1142
    %v1176 = vsub.f32 %v1127, %v1142
    %v1177 = vadd.f32 %v1167, 1e-05
    %v1178 = vadd.f32 %v1168, 1e-05
    %v1179 = vrsqrt.pop %v1177
    %v1180 = vrsqrt.pop %v1178
    %v1181 = vmul.f32 %v1169, %v1179
    %v1182 = vmul.f32 %v1170, %v1179
    %v1183 = vmul.f32 %v1171, %v1179
    %v1184 = vmul.f32 %v1172, %v1179
    %v1185 = vmul.f32 %v1173, %v1180
    %v1186 = vmul.f32 %v1174, %v1180
    %v1187 = vmul.f32 %v1175, %v1180
    %v1188 = vmul.f32 %v1176, %v1180
    %v1190 = vlaneseq
    %v1191 = vshrl.u32 %v1190, 7
    %v1192 = vsub.s32 0, %v1191
    %v1193 = vrot.slane %v1128, %v1192
    %v1194 = vlaneseq
    %v1195 = vshrl.u32 %v1194, 7
    %v1196 = vsub.s32 1, %v1195
    %v1197 = vrot.slane %v1128, %v1196
    %v1198 = vlaneseq
    %v1199 = vshrl.u32 %v1198, 7
    %v1200 = vsub.s32 2, %v1199
    %v1201 = vrot.slane %v1128, %v1200
    %v1202 = vlaneseq
    %v1203 = vshrl.u32 %v1202, 7
    %v1204 = vsub.s32 3, %v1203
    %v1205 = vrot.slane %v1128, %v1204
    %v1210 = vmul.f32 %v1181, %v1193
    %v1211 = vmul.f32 %v1182, %v1197
    %v1212 = vmul.f32 %v1183, %v1201
    %v1213 = vmul.f32 %v1184, %v1205
    %v1214 = vmul.f32 %v1185, %v1193
    %v1215 = vmul.f32 %v1186, %v1197
    %v1216 = vmul.f32 %v1187, %v1201
    %v1217 = vmul.f32 %v1188, %v1205
    %v1219 = vlaneseq
    %v1220 = vshrl.u32 %v1219, 7
    %v1221 = vsub.s32 0, %v1220
    %v1222 = vrot.slane %v1129, %v1221
    %v1223 = vlaneseq
    %v1224 = vshrl.u32 %v1223, 7
    %v1225 = vsub.s32 1, %v1224
    %v1226 = vrot.slane %v1129, %v1225
    %v1227 = vlaneseq
    %v1228 = vshrl.u32 %v1227, 7
    %v1229 = vsub.s32 2, %v1228
    %v1230 = vrot.slane %v1129, %v1229
    %v1231 = vlaneseq
    %v1232 = vshrl.u32 %v1231, 7
    %v1233 = vsub.s32 3, %v1232
    %v1234 = vrot.slane %v1129, %v1233
    %v1239 = vadd.f32 %v1210, %v1222
    %v1240 = vadd.f32 %v1211, %v1226
    %v1241 = vadd.f32 %v1212, %v1230
    %v1242 = vadd.f32 %v1213, %v1234
    %v1243 = vadd.f32 %v1214, %v1222
    %v1244 = vadd.f32 %v1215, %v1226
    %v1245 = vadd.f32 %v1216, %v1230
    %v1246 = vadd.f32 %v1217, %v1234
    %v1247 = vmax.f32 %v1239, 0.0
    %v1248 = vmax.f32 %v1240, 0.0
    %v1249 = vmax.f32 %v1241, 0.0
    %v1250 = vmax.f32 %v1242, 0.0
    %v1251 = vmax.f32 %v1243, 0.0
    %v1252 = vmax.f32 %v1244, 0.0
    %v1253 = vmax.f32 %v1245, 0.0
    %v1254 = vmax.f32 %v1246, 0.0
    %v1255 = vld [vmem:[#allocation17] sm:$0xf]
    %v1256 = vld [vmem:[#allocation17 + $0x4] sm:$0xf]
    %v1257 = vld [vmem:[#allocation17 + $0x8] sm:$0xf]
    %v1258 = vld [vmem:[#allocation17 + $0xc] sm:$0xf]
    %v1259 = vld [vmem:[#allocation17 + $0x10] sm:$0xf]
    %v1260 = vld [vmem:[#allocation17 + $0x14] sm:$0xf]
    %v1261 = vld [vmem:[#allocation17 + $0x18] sm:$0xf]
    %v1262 = vld [vmem:[#allocation17 + $0x1c] sm:$0xf]
    %v1263 = vld [vmem:[#allocation17 + $0x20] sm:$0xf]
    %v1264 = vld [vmem:[#allocation17 + $0x24] sm:$0xf]
    %v1265 = vld [vmem:[#allocation17 + $0x28] sm:$0xf]
    %v1266 = vld [vmem:[#allocation17 + $0x2c] sm:$0xf]
    %v1267 = vld [vmem:[#allocation17 + $0x30] sm:$0xf]
    %v1268 = vld [vmem:[#allocation17 + $0x34] sm:$0xf]
    %v1269 = vld [vmem:[#allocation17 + $0x38] sm:$0xf]
    %v1270 = vld [vmem:[#allocation17 + $0x3c] sm:$0xf]
    %v1271 = vld [vmem:[#allocation17 + $0x40] sm:$0xf]
    %v1272 = vld [vmem:[#allocation17 + $0x44] sm:$0xf]
    %v1273 = vld [vmem:[#allocation17 + $0x48] sm:$0xf]
    %v1274 = vld [vmem:[#allocation17 + $0x4c] sm:$0xf]
    %v1275 = vld [vmem:[#allocation17 + $0x50] sm:$0xf]
    %v1276 = vld [vmem:[#allocation17 + $0x54] sm:$0xf]
    %v1277 = vld [vmem:[#allocation17 + $0x58] sm:$0xf]
    %v1278 = vld [vmem:[#allocation17 + $0x5c] sm:$0xf]
    %v1279 = vld [vmem:[#allocation17 + $0x60] sm:$0xf]
    %v1280 = vld [vmem:[#allocation17 + $0x64] sm:$0xf]
    %v1281 = vld [vmem:[#allocation17 + $0x68] sm:$0xf]
    %v1282 = vld [vmem:[#allocation17 + $0x6c] sm:$0xf]
    %v1283 = vld [vmem:[#allocation17 + $0x70] sm:$0xf]
    %v1284 = vld [vmem:[#allocation17 + $0x74] sm:$0xf]
    %v1285 = vld [vmem:[#allocation17 + $0x78] sm:$0xf]
    %v1286 = vld [vmem:[#allocation17 + $0x7c] sm:$0xf]
    %v1287 = vld [vmem:[#allocation17 + $0x80] sm:$0xf]
    %v1288 = vld [vmem:[#allocation17 + $0x84] sm:$0xf]
    %v1289 = vld [vmem:[#allocation17 + $0x88] sm:$0xf]
    %v1290 = vld [vmem:[#allocation17 + $0x8c] sm:$0xf]
    %v1291 = vld [vmem:[#allocation17 + $0x90] sm:$0xf]
    %v1292 = vld [vmem:[#allocation17 + $0x94] sm:$0xf]
    %v1293 = vld [vmem:[#allocation17 + $0x98] sm:$0xf]
    %v1294 = vld [vmem:[#allocation17 + $0x9c] sm:$0xf]
    %v1295 = vld [vmem:[#allocation17 + $0xa0] sm:$0xf]
    %v1296 = vld [vmem:[#allocation17 + $0xa4] sm:$0xf]
    %v1297 = vld [vmem:[#allocation17 + $0xa8] sm:$0xf]
    %v1298 = vld [vmem:[#allocation17 + $0xac] sm:$0xf]
    %v1299 = vld [vmem:[#allocation17 + $0xb0] sm:$0xf]
    %v1300 = vld [vmem:[#allocation17 + $0xb4] sm:$0xf]
    %v1301 = vld [vmem:[#allocation17 + $0xb8] sm:$0xf]
    %v1302 = vld [vmem:[#allocation17 + $0xbc] sm:$0xf]
    %v1303 = vld [vmem:[#allocation17 + $0xc0] sm:$0xf]
    %v1304 = vld [vmem:[#allocation17 + $0xc4] sm:$0xf]
    %v1305 = vld [vmem:[#allocation17 + $0xc8] sm:$0xf]
    %v1306 = vld [vmem:[#allocation17 + $0xcc] sm:$0xf]
    %v1307 = vld [vmem:[#allocation17 + $0xd0] sm:$0xf]
    %v1308 = vld [vmem:[#allocation17 + $0xd4] sm:$0xf]
    %v1309 = vld [vmem:[#allocation17 + $0xd8] sm:$0xf]
    %v1310 = vld [vmem:[#allocation17 + $0xdc] sm:$0xf]
    %v1311 = vld [vmem:[#allocation17 + $0xe0] sm:$0xf]
    %v1312 = vld [vmem:[#allocation17 + $0xe4] sm:$0xf]
    %v1313 = vld [vmem:[#allocation17 + $0xe8] sm:$0xf]
    %v1314 = vld [vmem:[#allocation17 + $0xec] sm:$0xf]
    %v1315 = vld [vmem:[#allocation17 + $0xf0] sm:$0xf]
    %v1316 = vld [vmem:[#allocation17 + $0xf4] sm:$0xf]
    %v1317 = vld [vmem:[#allocation17 + $0xf8] sm:$0xf]
    %v1318 = vld [vmem:[#allocation17 + $0xfc] sm:$0xf]
    %v1319 = vpack.c.bf16 %v1251, %v1247
    %v1320 = vpack.c.bf16 %v1252, %v1248
    %v1321 = vpack.c.bf16 %v1253, %v1249
    %v1322 = vpack.c.bf16 %v1254, %v1250
    %v1323 = vld [vmem:[#allocation18] sm:$0x1]
    %v1325 = vlaneseq
    %v1326 = vshrl.u32 %v1325, 7
    %v1327 = vsub.s32 0, %v1326
    %v1328 = vrot.slane %v1323, %v1327
    %v1394 = vunpack.c.l.b16 %v1255
    %v1395 = vunpack.c.l.b16 %v1256
    %v1396 = vunpack.c.l.b16 %v1257
    %v1397 = vunpack.c.l.b16 %v1258
    %v1398 = vunpack.c.l.b16 %v1259
    %v1399 = vunpack.c.l.b16 %v1260
    %v1400 = vunpack.c.l.b16 %v1261
    %v1401 = vunpack.c.l.b16 %v1262
    %v1402 = vunpack.c.l.b16 %v1263
    %v1403 = vunpack.c.l.b16 %v1264
    %v1404 = vunpack.c.l.b16 %v1265
    %v1405 = vunpack.c.l.b16 %v1266
    %v1406 = vunpack.c.l.b16 %v1267
    %v1407 = vunpack.c.l.b16 %v1268
    %v1408 = vunpack.c.l.b16 %v1269
    %v1409 = vunpack.c.l.b16 %v1270
    %v1410 = vunpack.c.l.b16 %v1271
    %v1411 = vunpack.c.l.b16 %v1272
    %v1412 = vunpack.c.l.b16 %v1273
    %v1413 = vunpack.c.l.b16 %v1274
    %v1414 = vunpack.c.l.b16 %v1275
    %v1415 = vunpack.c.l.b16 %v1276
    %v1416 = vunpack.c.l.b16 %v1277
    %v1417 = vunpack.c.l.b16 %v1278
    %v1418 = vunpack.c.l.b16 %v1279
    %v1419 = vunpack.c.l.b16 %v1280
    %v1420 = vunpack.c.l.b16 %v1281
    %v1421 = vunpack.c.l.b16 %v1282
    %v1422 = vunpack.c.l.b16 %v1283
    %v1423 = vunpack.c.l.b16 %v1284
    %v1424 = vunpack.c.l.b16 %v1285
    %v1425 = vunpack.c.l.b16 %v1286
    %v1426 = vunpack.c.l.b16 %v1287
    %v1427 = vunpack.c.l.b16 %v1288
    %v1428 = vunpack.c.l.b16 %v1289
    %v1429 = vunpack.c.l.b16 %v1290
    %v1430 = vunpack.c.l.b16 %v1291
    %v1431 = vunpack.c.l.b16 %v1292
    %v1432 = vunpack.c.l.b16 %v1293
    %v1433 = vunpack.c.l.b16 %v1294
    %v1434 = vunpack.c.l.b16 %v1295
    %v1435 = vunpack.c.l.b16 %v1296
    %v1436 = vunpack.c.l.b16 %v1297
    %v1437 = vunpack.c.l.b16 %v1298
    %v1438 = vunpack.c.l.b16 %v1299
    %v1439 = vunpack.c.l.b16 %v1300
    %v1440 = vunpack.c.l.b16 %v1301
    %v1441 = vunpack.c.l.b16 %v1302
    %v1442 = vunpack.c.l.b16 %v1303
    %v1443 = vunpack.c.l.b16 %v1304
    %v1444 = vunpack.c.l.b16 %v1305
    %v1445 = vunpack.c.l.b16 %v1306
    %v1446 = vunpack.c.l.b16 %v1307
    %v1447 = vunpack.c.l.b16 %v1308
    %v1448 = vunpack.c.l.b16 %v1309
    %v1449 = vunpack.c.l.b16 %v1310
    %v1450 = vunpack.c.l.b16 %v1311
    %v1451 = vunpack.c.l.b16 %v1312
    %v1452 = vunpack.c.l.b16 %v1313
    %v1453 = vunpack.c.l.b16 %v1314
    %v1454 = vunpack.c.l.b16 %v1315
    %v1455 = vunpack.c.l.b16 %v1316
    %v1456 = vunpack.c.l.b16 %v1317
    %v1457 = vunpack.c.l.b16 %v1318
    %v1458 = vpack.c.b16 %v1395, %v1394
    %v1459 = vpack.c.b16 %v1397, %v1396
    %v1460 = vpack.c.b16 %v1399, %v1398
    %v1461 = vpack.c.b16 %v1401, %v1400
    %v1462 = vpack.c.b16 %v1403, %v1402
    %v1463 = vpack.c.b16 %v1405, %v1404
    %v1464 = vpack.c.b16 %v1407, %v1406
    %v1465 = vpack.c.b16 %v1409, %v1408
    %v1466 = vpack.c.b16 %v1411, %v1410
    %v1467 = vpack.c.b16 %v1413, %v1412
    %v1468 = vpack.c.b16 %v1415, %v1414
    %v1469 = vpack.c.b16 %v1417, %v1416
    %v1470 = vpack.c.b16 %v1419, %v1418
    %v1471 = vpack.c.b16 %v1421, %v1420
    %v1472 = vpack.c.b16 %v1423, %v1422
    %v1473 = vpack.c.b16 %v1425, %v1424
    %v1474 = vpack.c.b16 %v1427, %v1426
    %v1475 = vpack.c.b16 %v1429, %v1428
    %v1476 = vpack.c.b16 %v1431, %v1430
    %v1477 = vpack.c.b16 %v1433, %v1432
    %v1478 = vpack.c.b16 %v1435, %v1434
    %v1479 = vpack.c.b16 %v1437, %v1436
    %v1480 = vpack.c.b16 %v1439, %v1438
    %v1481 = vpack.c.b16 %v1441, %v1440
    %v1482 = vpack.c.b16 %v1443, %v1442
    %v1483 = vpack.c.b16 %v1445, %v1444
    %v1484 = vpack.c.b16 %v1447, %v1446
    %v1485 = vpack.c.b16 %v1449, %v1448
    %v1486 = vpack.c.b16 %v1451, %v1450
    %v1487 = vpack.c.b16 %v1453, %v1452
    %v1488 = vpack.c.b16 %v1455, %v1454
    %v1489 = vpack.c.b16 %v1457, %v1456
    %1522 = vmatprep.subr.bf16.mxu0 0
    %1523 = vmatpush1.bf16.msra.mxu0 %v1458
    %1524 = vmatprep.subr.bf16.mxu0 0
    %1525 = vmatpush1.bf16.msra.mxu0 %v1459
    %1526 = vmatprep.subr.bf16.mxu0 0
    %1527 = vmatpush1.bf16.msra.mxu0 %v1460
    %1528 = vmatprep.subr.bf16.mxu0 0
    %1529 = vmatpush1.bf16.msra.mxu0 %v1461
    %1530 = vmatprep.subr.bf16.mxu0 0
    %1531 = vmatpush1.bf16.msra.mxu0 %v1462
    %1532 = vmatprep.subr.bf16.mxu0 0
    %1533 = vmatpush1.bf16.msra.mxu0 %v1463
    %1534 = vmatprep.subr.bf16.mxu0 0
    %1535 = vmatpush1.bf16.msra.mxu0 %v1464
    %1536 = vmatprep.subr.bf16.mxu0 0
    %1537 = vmatpush1.bf16.msra.mxu0 %v1465
    %1538 = vmatprep.subr.bf16.mxu0 0
    %1539 = vmatpush1.bf16.msra.mxu0 %v1466
    %1540 = vmatprep.subr.bf16.mxu0 0
    %1541 = vmatpush1.bf16.msra.mxu0 %v1467
    %1542 = vmatprep.subr.bf16.mxu0 0
    %1543 = vmatpush1.bf16.msra.mxu0 %v1468
    %1544 = vmatprep.subr.bf16.mxu0 0
    %1545 = vmatpush1.bf16.msra.mxu0 %v1469
    %1546 = vmatprep.subr.bf16.mxu0 0
    %1547 = vmatpush1.bf16.msra.mxu0 %v1470
    %1548 = vmatprep.subr.bf16.mxu0 0
    %1549 = vmatpush1.bf16.msra.mxu0 %v1471
    %1550 = vmatprep.subr.bf16.mxu0 0
    %1551 = vmatpush1.bf16.msra.mxu0 %v1472
    %1552 = vmatprep.subr.bf16.mxu0 0
    %1553 = vmatpush1.bf16.msra.mxu0 %v1473
    %1554 = vmatprep.mubr.bf16.mxu0 %v1320
    %1555 = vmatmul.mubr.bf16.gmra.mrb[0].mxu0 %v1319
    %v1556 = vpop.f32.mrb[0].mxu0
    %v1557 = vadd.f32 %v1328, %v1556
    %v1558 = vpop.f32.mrb[0].mxu0
    %v1559 = vpop.f32.mrb[0].mxu0
    %v1560 = vadd.f32 %v1328, %v1559
    %v1561 = vpop.f32.mrb[0].mxu0
    %1562 = vdwg.mxu0
    %1563 = vmatprep.subr.bf16.mxu0 0
    %1564 = vmatpush1.bf16.msra.mxu0 %v1474
    %1565 = vmatprep.subr.bf16.mxu0 0
    %1566 = vmatpush1.bf16.msra.mxu0 %v1475
    %1567 = vmatprep.subr.bf16.mxu0 0
    %1568 = vmatpush1.bf16.msra.mxu0 %v1476
    %1569 = vmatprep.subr.bf16.mxu0 0
    %1570 = vmatpush1.bf16.msra.mxu0 %v1477
    %1571 = vmatprep.subr.bf16.mxu0 0
    %1572 = vmatpush1.bf16.msra.mxu0 %v1478
    %1573 = vmatprep.subr.bf16.mxu0 0
    %1574 = vmatpush1.bf16.msra.mxu0 %v1479
    %1575 = vmatprep.subr.bf16.mxu0 0
    %1576 = vmatpush1.bf16.msra.mxu0 %v1480
    %1577 = vmatprep.subr.bf16.mxu0 0
    %1578 = vmatpush1.bf16.msra.mxu0 %v1481
    %1579 = vmatprep.subr.bf16.mxu0 0
    %1580 = vmatpush1.bf16.msra.mxu0 %v1482
    %1581 = vmatprep.subr.bf16.mxu0 0
    %1582 = vmatpush1.bf16.msra.mxu0 %v1483
    %1583 = vmatprep.subr.bf16.mxu0 0
    %1584 = vmatpush1.bf16.msra.mxu0 %v1484
    %1585 = vmatprep.subr.bf16.mxu0 0
    %1586 = vmatpush1.bf16.msra.mxu0 %v1485
    %1587 = vmatprep.subr.bf16.mxu0 0
    %1588 = vmatpush1.bf16.msra.mxu0 %v1486
    %1589 = vmatprep.subr.bf16.mxu0 0
    %1590 = vmatpush1.bf16.msra.mxu0 %v1487
    %1591 = vmatprep.subr.bf16.mxu0 0
    %1592 = vmatpush1.bf16.msra.mxu0 %v1488
    %1593 = vmatprep.subr.bf16.mxu0 0
    %1594 = vmatpush1.bf16.msra.mxu0 %v1489
    %1595 = vmatprep.mubr.bf16.mxu0 %v1322
    %1596 = vmatmul.mubr.bf16.gmra.mrb[0].mxu0 %v1321
    %v1597 = vpop.f32.mrb[0].mxu0
    %v1598 = vadd.f32 %v1557, %v1597
    %v1599 = vpop.f32.mrb[0].mxu0
    %v1600 = vpop.f32.mrb[0].mxu0
    %v1601 = vadd.f32 %v1560, %v1600
    %v1602 = vpop.f32.mrb[0].mxu0
    %1603 = vdwg.mxu0
    %v1604 = vld [vmem:[#allocation20] sm:$0x1]
    %v1605 = vld [vmem:[#allocation21] sm:$0x1]
    %vm1606 = vcmask 261120
    %v1607 = vsel %vm1606, %v1598, 0.0
    %1608 = vadd.xlane.f32.xlu0 %v1607
    %v1609 = vpop.xlane.xlu0 %1608
    %v1610 = vsel %vm1606, %v1601, 0.0
    %1611 = vadd.xlane.f32.xlu0 %v1610
    %v1612 = vpop.xlane.xlu0 %1611
    %v1613 = vrcp.pop 32.0
    %v1614 = vmul.f32 %v1609, %v1613
    %v1615 = vmul.f32 %v1612, %v1613
    %v1616 = vmul.f32 %v1598, %v1598
    %v1617 = vmul.f32 %v1601, %v1601
    %v1618 = vsel %vm1606, %v1616, 0.0
    %1619 = vadd.xlane.f32.xlu0 %v1618
    %v1620 = vpop.xlane.xlu0 %1619
    %v1621 = vsel %vm1606, %v1617, 0.0
    %1622 = vadd.xlane.f32.xlu0 %v1621
    %v1623 = vpop.xlane.xlu0 %1622
    %v1624 = vmul.f32 %v1620, %v1613
    %v1625 = vmul.f32 %v1623, %v1613
    %v1626 = vmul.f32 %v1614, %v1614
    %v1627 = vmul.f32 %v1615, %v1615
    %v1628 = vsub.f32 %v1624, %v1626
    %v1629 = vsub.f32 %v1625, %v1627
    %v1630 = vmax.f32 %v1628, 0.0
    %v1631 = vmax.f32 %v1629, 0.0
    %v1632 = vsub.f32 %v1598, %v1614
    %v1633 = vsub.f32 %v1601, %v1615
    %v1634 = vadd.f32 %v1630, 1e-05
    %v1635 = vadd.f32 %v1631, 1e-05
    %v1636 = vrsqrt.pop %v1634
    %v1637 = vrsqrt.pop %v1635
    %v1638 = vmul.f32 %v1632, %v1636
    %v1639 = vmul.f32 %v1633, %v1637
    %v1641 = vlaneseq
    %v1642 = vshrl.u32 %v1641, 7
    %v1643 = vsub.s32 0, %v1642
    %v1644 = vrot.slane %v1604, %v1643
    %v1646 = vmul.f32 %v1638, %v1644
    %v1647 = vmul.f32 %v1639, %v1644
    %v1649 = vlaneseq
    %v1650 = vshrl.u32 %v1649, 7
    %v1651 = vsub.s32 0, %v1650
    %v1652 = vrot.slane %v1605, %v1651
    %v1654 = vadd.f32 %v1646, %v1652
    %v1655 = vadd.f32 %v1647, %v1652
    %v1656 = vmax.f32 %v1654, 0.0
    %v1657 = vmax.f32 %v1655, 0.0
    %v1658 = vld [vmem:[#allocation23] sm:$0x1]
    %v1660 = vlaneseq
    %v1661 = vshrl.u32 %v1660, 7
    %v1662 = vsub.s32 0, %v1661
    %v1663 = vrot.slane %v1658, %v1662
    %v1665 = vmul.f32 %v1656, %v1663
    %v1666 = vmul.f32 %v1657, %v1663
    %v1667 = vsel %vm1606, %v1665, 0.0
    %1668 = vadd.xlane.f32.xlu0 %v1667
    %v1669 = vpop.xlane.xlu0 %1668
    %v1670 = vsel %vm1606, %v1666, 0.0
    %1671 = vadd.xlane.f32.xlu0 %v1670
    %v1672 = vpop.xlane.xlu0 %1671
    %v1673 = vld [vmem:[#allocation2] sm:$0x1]
    %v1675 = vlaneseq
    %v1676 = vshrl.u32 %v1675, 7
    %v1677 = vsub.s32 0, %v1676
    %v1678 = vrot.slane %v1673, %v1677
    %v1680 = vadd.f32 %v1669, %v1678
    %v1681 = vadd.f32 %v1672, %v1678
    %vm1682 = vcmask 7168
    %1683 = vst.msk [vmem:[#allocation24] sm:$0xff] %vm1682, %v1680
    %1684 = vst.msk [vmem:[#allocation24 + $0x8] sm:$0xff] %vm1682, %v1681
    // Predicated region
    $region110: #{dnet_forward.1} parent=1 // pred_check
      _
    $region111: #{dnet_forward.1} parent=1 // pred_check_branch
      %1686 = sbr.rel (0) target = $region113
    $region112: #{dnet_forward.1} parent=1 // pred_region
      %s1688 = ssub.s32 256, 32
      %1689 = vsyncadd [#allocation5], %s1688
      %s1690 = sshll.u32 [#allocation24], 4
      %s1691 = int_to_ptr.vmem [resolvable:$true] %s1690
      %1696 = dma.vmem_to_hbm [thread:$0]  %s1691, 32, %s14, [#allocation5], 32, 32, 2
    $region113: #{dnet_forward.1} parent=1 // pred_fallthru
      _
    // Predicated region
    $region114: #{dnet_forward.1} parent=1 // pred_check
      _
    $region115: #{dnet_forward.1} parent=1 // pred_check_branch
      %1698 = sbr.rel (0) target = $region117
    $region116: #{dnet_forward.1} parent=1 // pred_region
      %1699 = dma.done [#allocation5], 256
    $region117: #{dnet_forward.1} parent=1 // pred_fallthru
      _
    %1700 = vsyncpa [#allocation4], 1
    %1701 = vsyncpa [#allocation7], 1
    %1702 = vsyncpa [#allocation10], 1
    %1703 = vsyncpa [#allocation13], 1
    %1704 = vsyncpa [#allocation16], 1
    %1705 = vsyncpa [#allocation19], 1
    %1706 = vsyncpa [#allocation22], 1
    %1707 = vsyncpa [#allocation5], 1

</llo_original>
